<compile_context>
chip_gen: v7x
topology: tpu7x:2x2x1
jax: 0.10.0
libtpu: 0.0.40
codegen_flags: <defaults>
</compile_context>

<pallas_src>
import functools
import math

import jax
import jax.numpy as jnp
import numpy as np
from jax import lax
from jax.experimental import pallas as pl
from jax.experimental.pallas import tpu as pltpu

_NORM_EPS = 1e-12   # torch.nn.functional.normalize eps (util.cos_sim)
_NEG = -1e30        # finite "-inf": avoids inf-inf / nan in masked math


def _ntxent_fused_kernel(q_ref, k_ref, row_ref, pcm_ref, pcl_ref,
                         m_sc, l_sc, d_sc, *, inv_tau, n_valid, tile):
    """One (query-tile i, key-tile j) grid step of the fused NTXent pass.

    Row (a2t) direction: online logsumexp over key tiles, finalized at the
    last j together with the shared diagonal (lane-dense (tile, 128) store).
    Column (t2a) direction: per-(i, j) partial column max / sumexp blocks,
    merged outside the kernel (keeps the i axis "parallel")."""
    i = pl.program_id(0)      # query/row tile  ("parallel")
    j = pl.program_id(1)      # key/col  tile   ("arbitrary", innermost)

    @pl.when(j == 0)
    def _init():
        m_sc[...] = jnp.full_like(m_sc, _NEG)
        l_sc[...] = jnp.zeros_like(l_sc)
        d_sc[...] = jnp.zeros_like(d_sc)

    # (tile, tile) similarity block on the MXU: bf16 (or f32) inputs,
    # f32 accumulation; scale by 1/tau afterwards in f32.
    s = lax.dot_general(q_ref[...], k_ref[...], (((1,), (1,)), ((), ())),
                        preferred_element_type=jnp.float32) * inv_tau

    if n_valid % tile != 0:   # static: only compiled in when the batch is padded
        col = j * tile + lax.broadcasted_iota(jnp.int32, s.shape, 1)
        row = i * tile + lax.broadcasted_iota(jnp.int32, s.shape, 0)
        s_row = jnp.where(col < n_valid, s, _NEG)   # drop padded key columns
        s_col = jnp.where(row < n_valid, s, _NEG)   # drop padded query rows
    else:
        s_row = s_col = s

    # --- a2t: online logsumexp along the key axis (query rows resident) -----
    m_prev = m_sc[...]
    m_new = jnp.maximum(m_prev, jnp.max(s_row, axis=1, keepdims=True))
    alpha = jnp.exp(m_prev - m_new)
    l_sc[...] = alpha * l_sc[...] + jnp.sum(jnp.exp(s_row - m_new),
                                            axis=1, keepdims=True)
    m_sc[...] = m_new

    # --- shared diagonal S[r, r]: extracted from the existing s block -------
    @pl.when(j == i)
    def _diag():
        r_loc = lax.broadcasted_iota(jnp.int32, s.shape, 0)
        c_loc = lax.broadcasted_iota(jnp.int32, s.shape, 1)
        d_sc[...] = jnp.sum(jnp.where(r_loc == c_loc, s_row, 0.0),
                            axis=1, keepdims=True)

    # --- t2a: per-(i, j) partial column stats (merged by the JAX epilogue) --
    cmax = jnp.max(s_col, axis=0, keepdims=True)                    # (1, tile)
    csum = jnp.sum(jnp.exp(s_col - cmax), axis=0, keepdims=True)    # (1, tile)
    pcm_ref[...] = jnp.broadcast_to(cmax, pcm_ref.shape)
    pcl_ref[...] = jnp.broadcast_to(csum, pcl_ref.shape)

    @pl.when(j == pl.num_programs(1) - 1)
    def _finalize():
        lse_row = m_sc[...] + jnp.log(l_sc[...])                    # (tile, 1)
        lane = lax.broadcasted_iota(jnp.int32, row_ref.shape, 1)
        row_ref[...] = jnp.where(lane == 0, lse_row,
                                 jnp.where(lane == 1, d_sc[...], 0.0))


def _ntxent_fused(a_n, t_n, *, inv_tau, tile, n_valid):
    """a_n, t_n: (Bp, D), L2-normalized, Bp % tile == 0.
    Returns (lse_row, diag, lse_col), each (n_valid,) float32 where
      lse_row[i] = logsumexp_c S[i, c],  diag[i] = S[i, i],
      lse_col[i] = logsumexp_r S[r, i],  S = a_n @ t_n.T * inv_tau."""
    Bp, D = a_n.shape
    n_t = Bp // tile
    dsize = jnp.dtype(a_n.dtype).itemsize

    kernel = functools.partial(_ntxent_fused_kernel, inv_tau=inv_tau,
                               n_valid=n_valid, tile=tile)

    cost = pl.CostEstimate(
        flops=2 * Bp * Bp * D,
        transcendentals=2 * Bp * Bp,
        bytes_accessed=(n_t + 1) * Bp * D * dsize
        + Bp * 128 * 4 + 2 * n_t * 8 * Bp * 4)

    params = {"dimension_semantics": ("parallel", "arbitrary")}
    # ~ double-buffered input tiles + similarity block + small outputs/scratch.
    vmem_est = 4 * tile * D * dsize + 6 * tile * tile * 4 + 4 * tile * 128 * 4
    if vmem_est > 24 * 1024 * 1024:   # leave headroom; cap below v7x physical
        params["vmem_limit_bytes"] = int(min(2 * vmem_est, 64 * 1024 * 1024))

    row_out, pcm, pcl = pl.pallas_call(
        kernel,
        out_shape=(
            jax.ShapeDtypeStruct((Bp, 128), jnp.float32),      # lane0=lse, lane1=diag
            jax.ShapeDtypeStruct((n_t * 8, Bp), jnp.float32),  # partial col max
            jax.ShapeDtypeStruct((n_t * 8, Bp), jnp.float32),  # partial col sumexp
        ),
        grid_spec=pltpu.PrefetchScalarGridSpec(
            num_scalar_prefetch=0,
            grid=(n_t, n_t),
            in_specs=[
                pl.BlockSpec((tile, D), lambda i, j: (i, 0)),  # query rows (resident)
                pl.BlockSpec((tile, D), lambda i, j: (j, 0)),  # key rows (streamed)
            ],
            out_specs=[
                pl.BlockSpec((tile, 128), lambda i, j: (i, 0)),
                pl.BlockSpec((8, tile), lambda i, j: (i, j)),
                pl.BlockSpec((8, tile), lambda i, j: (i, j)),
            ],
            scratch_shapes=[pltpu.VMEM((tile, 1), jnp.float32)] * 3,  # m, l, diag
        ),
        compiler_params=pltpu.CompilerParams(**params),
        cost_estimate=cost,
    )(a_n, t_n)

    lse_row = row_out[:n_valid, 0]
    diag = row_out[:n_valid, 1]

    # Merge per-row-tile partial column stats into the full column logsumexp.
    pcm = pcm.reshape(n_t, 8, Bp)[:, 0, :n_valid]   # (n_t, B)
    pcl = pcl.reshape(n_t, 8, Bp)[:, 0, :n_valid]
    m_col = jnp.max(pcm, axis=0)                    # (B,)
    lse_col = m_col + jnp.log(jnp.sum(pcl * jnp.exp(pcm - m_col[None, :]), axis=0))
    return lse_row, diag, lse_col


def ntxent_loss(audio_embeds, text_embeds, labels=None, *,
                temperature=0.07, epsilon=0.1, mxu_dtype=jnp.bfloat16):
    """Matches NTXent.forward. `labels` / `epsilon` never influence the value
    the reference returns (see header comment), so they are ignored here."""
    del labels, epsilon
    a = audio_embeds.astype(jnp.float32)
    t = text_embeds.astype(jnp.float32)
    B, D = a.shape
    inv_tau = 1.0 / float(temperature)

    # L2-normalize ONCE in f32 (matches F.normalize eps), then drop to the MXU
    # dtype; every (i, j) tile and both directions reuse these copies.
    def _l2norm(x):
        n = jnp.sqrt(jnp.sum(x * x, axis=1, keepdims=True))
        return x / jnp.maximum(n, _NORM_EPS)

    a_n = _l2norm(a).astype(mxu_dtype)
    t_n = _l2norm(t).astype(mxu_dtype)

    # Lane-dense 128-row tiles for small batches (pad up to 128), 256 for large
    # batches (fills the 256-wide v6e/v7x MXUs, halves key re-streaming).
    tile = 256 if B >= 256 else 128
    Bp = int(math.ceil(B / tile) * tile)
    if Bp != B:
        pad = ((0, Bp - B), (0, 0))
        a_n, t_n = jnp.pad(a_n, pad), jnp.pad(t_n, pad)

    lse_row, diag, lse_col = _ntxent_fused(a_n, t_n, inv_tau=inv_tau,
                                           tile=tile, n_valid=B)
    a2t_loss = jnp.mean(lse_row - diag)   # -mean diag log_softmax(S,   axis=1)
    t2a_loss = jnp.mean(lse_col - diag)   # -mean diag log_softmax(S.T, axis=1)
    return 0.5 * a2t_loss + 0.5 * t2a_loss


def _reference(a, t, tau):
    """Pure-JAX mirror of the PyTorch forward (returned value only)."""
    a_n = a / jnp.maximum(jnp.sqrt(jnp.sum(a * a, axis=1, keepdims=True)), _NORM_EPS)
    t_n = t / jnp.maximum(jnp.sqrt(jnp.sum(t * t, axis=1, keepdims=True)), _NORM_EPS)
    a2t = (a_n @ t_n.T) / tau
    a2t_loss = -jnp.mean(jnp.diag(jax.nn.log_softmax(a2t, axis=1)))
    t2a_loss = -jnp.mean(jnp.diag(jax.nn.log_softmax(a2t.T, axis=1)))
    return 0.5 * a2t_loss + 0.5 * t2a_loss


if __name__ == "__main__":
    B, D = 8, 32
    key = jax.random.PRNGKey(0)
    ka, kt, kl = jax.random.split(key, 3)
    audio = jax.random.normal(ka, (B, D), dtype=jnp.float32)
    text = jax.random.normal(kt, (B, D), dtype=jnp.float32)
    labels = jax.random.randint(kl, (B,), 0, B, dtype=jnp.int32)

    ref = _reference(audio, text, 0.07)

    # Default production path: bf16 MXU inputs, f32 accumulation.
    loss_bf16 = jax.block_until_ready(
        ntxent_loss(audio, text, labels, temperature=0.07, epsilon=0.1))
    np.testing.assert_allclose(np.asarray(loss_bf16), np.asarray(ref),
                               rtol=2e-2, atol=2e-2)

    # f32 MXU path: tight numerical check of the fused-kernel structure.
    loss_f32 = jax.block_until_ready(
        ntxent_loss(audio, text, labels, temperature=0.07, epsilon=0.1,
                    mxu_dtype=jnp.float32))
    np.testing.assert_allclose(np.asarray(loss_f32), np.asarray(ref),
                               rtol=1e-4, atol=1e-4)

    print("KERNEL_OK")
</pallas_src>

<mosaic_0001>
module attributes {stable_mosaic.version = 11 : i64} {
  func.func @_ntxent_fused_kernel(%arg0: i32, %arg1: i32, %arg2: memref<128x32xbf16, #tpu.memory_space<vmem>>, %arg3: memref<128x32xbf16, #tpu.memory_space<vmem>>, %arg4: memref<128x128xf32, #tpu.memory_space<vmem>>, %arg5: memref<8x128xf32, #tpu.memory_space<vmem>>, %arg6: memref<8x128xf32, #tpu.memory_space<vmem>>, %arg7: memref<128x1xf32, #tpu.memory_space<vmem>>, %arg8: memref<128x1xf32, #tpu.memory_space<vmem>>, %arg9: memref<128x1xf32, #tpu.memory_space<vmem>>) attributes {dimension_semantics = [#tpu.dimension_semantics<parallel>, #tpu.dimension_semantics<arbitrary>], iteration_bounds = array<i64: 1, 1>, scalar_prefetch = 0 : i64, scratch_operands = 3 : i64, tpu.core_type = #tpu.core_type<tc>, window_params = [{transform_indices = @transform_0, window_bounds = array<i64: 128, 32>}, {transform_indices = @transform_1, window_bounds = array<i64: 128, 32>}, {transform_indices = @transform_2, window_bounds = array<i64: 128, 128>}, {transform_indices = @transform_3, window_bounds = array<i64: 8, 128>}, {transform_indices = @transform_4, window_bounds = array<i64: 8, 128>}]} {
    %c0_i32 = arith.constant 0 : i32
    %0 = arith.cmpi eq, %arg1, %c0_i32 : i32
    %1 = arith.extui %0 : i1 to i32
    %c0_i32_0 = arith.constant 0 : i32
    %2 = arith.cmpi ne, %1, %c0_i32_0 : i32
    scf.if %2 {
      %cst_28 = arith.constant -1.000000e+30 : f32
      %59 = vector.broadcast %cst_28 : f32 to vector<128x1xf32>
      %c0_29 = arith.constant 0 : index
      %c0_30 = arith.constant 0 : index
      %60 = vector.load %arg7[%c0_29, %c0_30] : memref<128x1xf32, #tpu.memory_space<vmem>>, vector<128x1xf32>
      tpu.vector_store %arg7[%c0_29, %c0_30], %59 {strides = array<i32>} : memref<128x1xf32, #tpu.memory_space<vmem>>, vector<128x1xf32>,
      %cst_31 = arith.constant 0.000000e+00 : f32
      %61 = vector.broadcast %cst_31 : f32 to vector<128x1xf32>
      %c0_32 = arith.constant 0 : index
      %c0_33 = arith.constant 0 : index
      %62 = vector.load %arg8[%c0_32, %c0_33] : memref<128x1xf32, #tpu.memory_space<vmem>>, vector<128x1xf32>
      tpu.vector_store %arg8[%c0_32, %c0_33], %61 {strides = array<i32>} : memref<128x1xf32, #tpu.memory_space<vmem>>, vector<128x1xf32>,
      %cst_34 = arith.constant 0.000000e+00 : f32
      %63 = vector.broadcast %cst_34 : f32 to vector<128x1xf32>
      %c0_35 = arith.constant 0 : index
      %c0_36 = arith.constant 0 : index
      %64 = vector.load %arg9[%c0_35, %c0_36] : memref<128x1xf32, #tpu.memory_space<vmem>>, vector<128x1xf32>
      tpu.vector_store %arg9[%c0_35, %c0_36], %63 {strides = array<i32>} : memref<128x1xf32, #tpu.memory_space<vmem>>, vector<128x1xf32>,
    } else {
    }
    %c0 = arith.constant 0 : index
    %c0_1 = arith.constant 0 : index
    %3 = vector.load %arg2[%c0, %c0_1] : memref<128x32xbf16, #tpu.memory_space<vmem>>, vector<128x32xbf16>
    %c0_2 = arith.constant 0 : index
    %c0_3 = arith.constant 0 : index
    %4 = vector.load %arg3[%c0_2, %c0_3] : memref<128x32xbf16, #tpu.memory_space<vmem>>, vector<128x32xbf16>
    %cst = arith.constant dense<0.000000e+00> : vector<128x128xf32>
    %5 = tpu.matmul %3, %4, %cst {dimension_numbers = #tpu.dot_dimension_numbers<[1], [1], [0], [0], [0, 0, 1, 0], [], []>} : vector<128x32xbf16>, vector<128x32xbf16>, vector<128x128xf32> -> vector<128x128xf32>
    %cst_4 = arith.constant 14.2857141 : f32
    %6 = vector.broadcast %cst_4 : f32 to vector<128x128xf32>
    %7 = arith.mulf %5, %6 : vector<128x128xf32>
    %c128_i32 = arith.constant 128 : i32
    %8 = arith.muli %arg1, %c128_i32 : i32
    %9 = tpu.iota {dimensions = array<i32: 1>} : vector<128x128xi32>
    %10 = vector.broadcast %8 : i32 to vector<128x128xi32>
    %11 = arith.addi %10, %9 : vector<128x128xi32>
    %c128_i32_5 = arith.constant 128 : i32
    %12 = arith.muli %arg0, %c128_i32_5 : i32
    %13 = tpu.iota {dimensions = array<i32: 0>} : vector<128x128xi32>
    %14 = vector.broadcast %12 : i32 to vector<128x128xi32>
    %15 = arith.addi %14, %13 : vector<128x128xi32>
    %c8_i32 = arith.constant 8 : i32
    %16 = vector.broadcast %c8_i32 : i32 to vector<128x128xi32>
    %17 = arith.cmpi slt, %11, %16 : vector<128x128xi32>
    %cst_6 = arith.constant -1.000000e+30 : f32
    %18 = vector.broadcast %cst_6 : f32 to vector<128x128xf32>
    %19 = arith.select %17, %7, %18 : vector<128x128xi1>, vector<128x128xf32>
    %c8_i32_7 = arith.constant 8 : i32
    %20 = vector.broadcast %c8_i32_7 : i32 to vector<128x128xi32>
    %21 = arith.cmpi slt, %15, %20 : vector<128x128xi32>
    %cst_8 = arith.constant -1.000000e+30 : f32
    %22 = vector.broadcast %cst_8 : f32 to vector<128x128xf32>
    %23 = arith.select %21, %7, %22 : vector<128x128xi1>, vector<128x128xf32>
    %c0_9 = arith.constant 0 : index
    %c0_10 = arith.constant 0 : index
    %24 = vector.load %arg7[%c0_9, %c0_10] : memref<128x1xf32, #tpu.memory_space<vmem>>, vector<128x1xf32>
    %cst_11 = arith.constant dense<0xFF800000> : vector<128xf32>
    %25 = vector.multi_reduction <maximumf>, %19, %cst_11 [1] : vector<128x128xf32> to vector<128xf32>
    %26 = vector.shape_cast %25 : vector<128xf32> to vector<128x1xf32>
    %27 = arith.maximumf %24, %26 : vector<128x1xf32>
    %28 = arith.subf %24, %27 : vector<128x1xf32>
    %29 = math.exp %28 : vector<128x1xf32>
    %c0_12 = arith.constant 0 : index
    %c0_13 = arith.constant 0 : index
    %30 = vector.load %arg8[%c0_12, %c0_13] : memref<128x1xf32, #tpu.memory_space<vmem>>, vector<128x1xf32>
    %31 = arith.mulf %29, %30 : vector<128x1xf32>
    %32 = vector.broadcast %27 : vector<128x1xf32> to vector<128x128xf32>
    %33 = arith.subf %19, %32 : vector<128x128xf32>
    %34 = math.exp %33 : vector<128x128xf32>
    %cst_14 = arith.constant dense<0.000000e+00> : vector<128xf32>
    %35 = vector.multi_reduction <add>, %34, %cst_14 [1] : vector<128x128xf32> to vector<128xf32>
    %36 = vector.shape_cast %35 : vector<128xf32> to vector<128x1xf32>
    %37 = arith.addf %31, %36 : vector<128x1xf32>
    %c0_15 = arith.constant 0 : index
    %c0_16 = arith.constant 0 : index
    %38 = vector.load %arg8[%c0_15, %c0_16] : memref<128x1xf32, #tpu.memory_space<vmem>>, vector<128x1xf32>
    tpu.vector_store %arg8[%c0_15, %c0_16], %37 {strides = array<i32>} : memref<128x1xf32, #tpu.memory_space<vmem>>, vector<128x1xf32>,
    %c0_17 = arith.constant 0 : index
    %c0_18 = arith.constant 0 : index
    %39 = vector.load %arg7[%c0_17, %c0_18] : memref<128x1xf32, #tpu.memory_space<vmem>>, vector<128x1xf32>
    tpu.vector_store %arg7[%c0_17, %c0_18], %27 {strides = array<i32>} : memref<128x1xf32, #tpu.memory_space<vmem>>, vector<128x1xf32>,
    %40 = arith.cmpi eq, %arg1, %arg0 : i32
    %41 = arith.extui %40 : i1 to i32
    %c0_i32_19 = arith.constant 0 : i32
    %42 = arith.cmpi ne, %41, %c0_i32_19 : i32
    scf.if %42 {
      %59 = tpu.iota {dimensions = array<i32: 0>} : vector<128x128xi32>
      %60 = tpu.iota {dimensions = array<i32: 1>} : vector<128x128xi32>
      %61 = arith.cmpi eq, %59, %60 : vector<128x128xi32>
      %cst_28 = arith.constant 0.000000e+00 : f32
      %62 = vector.broadcast %cst_28 : f32 to vector<128x128xf32>
      %63 = arith.select %61, %19, %62 : vector<128x128xi1>, vector<128x128xf32>
      %cst_29 = arith.constant dense<0.000000e+00> : vector<128xf32>
      %64 = vector.multi_reduction <add>, %63, %cst_29 [1] : vector<128x128xf32> to vector<128xf32>
      %65 = vector.shape_cast %64 : vector<128xf32> to vector<128x1xf32>
      %c0_30 = arith.constant 0 : index
      %c0_31 = arith.constant 0 : index
      %66 = vector.load %arg9[%c0_30, %c0_31] : memref<128x1xf32, #tpu.memory_space<vmem>>, vector<128x1xf32>
      tpu.vector_store %arg9[%c0_30, %c0_31], %65 {strides = array<i32>} : memref<128x1xf32, #tpu.memory_space<vmem>>, vector<128x1xf32>,
    } else {
    }
    %cst_20 = arith.constant dense<0xFF800000> : vector<128xf32>
    %43 = vector.multi_reduction <maximumf>, %23, %cst_20 [0] : vector<128x128xf32> to vector<128xf32>
    %44 = vector.shape_cast %43 : vector<128xf32> to vector<1x128xf32>
    %45 = vector.broadcast %44 : vector<1x128xf32> to vector<128x128xf32>
    %46 = arith.subf %23, %45 : vector<128x128xf32>
    %47 = math.exp %46 : vector<128x128xf32>
    %cst_21 = arith.constant dense<0.000000e+00> : vector<128xf32>
    %48 = vector.multi_reduction <add>, %47, %cst_21 [0] : vector<128x128xf32> to vector<128xf32>
    %49 = vector.shape_cast %48 : vector<128xf32> to vector<1x128xf32>
    %50 = vector.shape_cast %44 : vector<1x128xf32> to vector<1x128xf32>
    %51 = vector.broadcast %50 : vector<1x128xf32> to vector<8x128xf32>
    %c0_22 = arith.constant 0 : index
    %c0_23 = arith.constant 0 : index
    %52 = vector.load %arg5[%c0_22, %c0_23] : memref<8x128xf32, #tpu.memory_space<vmem>>, vector<8x128xf32>
    tpu.vector_store %arg5[%c0_22, %c0_23], %51 {strides = array<i32>} : memref<8x128xf32, #tpu.memory_space<vmem>>, vector<8x128xf32>,
    %53 = vector.shape_cast %49 : vector<1x128xf32> to vector<1x128xf32>
    %54 = vector.broadcast %53 : vector<1x128xf32> to vector<8x128xf32>
    %c0_24 = arith.constant 0 : index
    %c0_25 = arith.constant 0 : index
    %55 = vector.load %arg6[%c0_24, %c0_25] : memref<8x128xf32, #tpu.memory_space<vmem>>, vector<8x128xf32>
    tpu.vector_store %arg6[%c0_24, %c0_25], %54 {strides = array<i32>} : memref<8x128xf32, #tpu.memory_space<vmem>>, vector<8x128xf32>,
    %c0_i32_26 = arith.constant 0 : i32
    %56 = arith.cmpi eq, %arg1, %c0_i32_26 : i32
    %57 = arith.extui %56 : i1 to i32
    %c0_i32_27 = arith.constant 0 : i32
    %58 = arith.cmpi ne, %57, %c0_i32_27 : i32
    scf.if %58 {
      %c0_28 = arith.constant 0 : index
      %c0_29 = arith.constant 0 : index
      %59 = vector.load %arg7[%c0_28, %c0_29] : memref<128x1xf32, #tpu.memory_space<vmem>>, vector<128x1xf32>
      %c0_30 = arith.constant 0 : index
      %c0_31 = arith.constant 0 : index
      %60 = vector.load %arg8[%c0_30, %c0_31] : memref<128x1xf32, #tpu.memory_space<vmem>>, vector<128x1xf32>
      %61 = math.log %60 : vector<128x1xf32>
      %62 = arith.addf %59, %61 : vector<128x1xf32>
      %63 = tpu.iota {dimensions = array<i32: 1>} : vector<128x128xi32>
      %c0_i32_32 = arith.constant 0 : i32
      %64 = vector.broadcast %c0_i32_32 : i32 to vector<128x128xi32>
      %65 = arith.cmpi eq, %63, %64 : vector<128x128xi32>
      %c1_i32 = arith.constant 1 : i32
      %66 = vector.broadcast %c1_i32 : i32 to vector<128x128xi32>
      %67 = arith.cmpi eq, %63, %66 : vector<128x128xi32>
      %c0_33 = arith.constant 0 : index
      %c0_34 = arith.constant 0 : index
      %68 = vector.load %arg9[%c0_33, %c0_34] : memref<128x1xf32, #tpu.memory_space<vmem>>, vector<128x1xf32>
      %cst_35 = arith.constant 0.000000e+00 : f32
      %69 = vector.shape_cast %68 : vector<128x1xf32> to vector<128x1xf32>
      %70 = vector.broadcast %69 : vector<128x1xf32> to vector<128x128xf32>
      %71 = vector.broadcast %cst_35 : f32 to vector<128x128xf32>
      %72 = arith.select %67, %70, %71 : vector<128x128xi1>, vector<128x128xf32>
      %73 = vector.shape_cast %62 : vector<128x1xf32> to vector<128x1xf32>
      %74 = vector.broadcast %73 : vector<128x1xf32> to vector<128x128xf32>
      %75 = arith.select %65, %74, %72 : vector<128x128xi1>, vector<128x128xf32>
      %c0_36 = arith.constant 0 : index
      %c0_37 = arith.constant 0 : index
      %76 = vector.load %arg4[%c0_36, %c0_37] : memref<128x128xf32, #tpu.memory_space<vmem>>, vector<128x128xf32>
      tpu.vector_store %arg4[%c0_36, %c0_37], %75 {strides = array<i32>} : memref<128x128xf32, #tpu.memory_space<vmem>>, vector<128x128xf32>,
    } else {
    }
    return
  }
  func.func @transform_0(%arg0: i32, %arg1: i32) -> (i32, i32) {
    %c0_i32 = arith.constant 0 : i32
    %c0_i32_0 = arith.constant 0 : i32
    return %arg0, %c0_i32 : i32, i32
  }
  func.func @transform_1(%arg0: i32, %arg1: i32) -> (i32, i32) {
    %c0_i32 = arith.constant 0 : i32
    %c0_i32_0 = arith.constant 0 : i32
    return %arg1, %c0_i32 : i32, i32
  }
  func.func @transform_2(%arg0: i32, %arg1: i32) -> (i32, i32) {
    %c0_i32 = arith.constant 0 : i32
    %c0_i32_0 = arith.constant 0 : i32
    return %arg0, %c0_i32 : i32, i32
  }
  func.func @transform_3(%arg0: i32, %arg1: i32) -> (i32, i32) {
    %c0_i32 = arith.constant 0 : i32
    return %arg0, %arg1 : i32, i32
  }
  func.func @transform_4(%arg0: i32, %arg1: i32) -> (i32, i32) {
    %c0_i32 = arith.constant 0 : i32
    return %arg0, %arg1 : i32, i32
  }
}

</mosaic_0001>

<llo_original>
// kernel: tpu_custom_call.1
$region0: #{tpu_custom_call.1}
  #allocation0 [shape = 'u32[]', space=smem, size = 0x4, offset = 0x4, fixed_abs, tag = 'smem constant byte address 0x4 - core index']
  #allocation1 [shape = 'u32[144,128]{1,0:T(1,128)}', space=vmem, size = 0x12000, scoped, tag = 'internal scratch']
  #allocation2 [shape = 'f32[128,1]{1,0:T(8,128)}', space=vmem, size = 0x10000, scoped, tag = 'scratch operand']
  #allocation3 [shape = 'f32[128,1]{1,0:T(8,128)}', space=vmem, size = 0x10000, scoped, tag = 'scratch operand']
  #allocation4 [shape = 'f32[128,1]{1,0:T(8,128)}', space=vmem, size = 0x10000, scoped, tag = 'scratch operand']
  %s0 = inlined_call_operand.vmem [shape: bf16[128,32], index: 0, kind: input, shape index: {}]
  %s1 = inlined_call_operand.vmem [shape: bf16[128,32], index: 1, kind: input, shape index: {}]
  %s2 = inlined_call_operand.hbm [shape: f32[128,128], index: 2, kind: output, shape index: {0}]
  %s3 = inlined_call_operand.hbm [shape: f32[8,128], index: 3, kind: output, shape index: {1}]
  %s4 = inlined_call_operand.hbm [shape: f32[8,128], index: 4, kind: output, shape index: {2}]
  %5 = xla_tuple %s2, %s3, %s4
  %s6 = sld [smem:[#allocation0]]
  $region46: #{tpu_custom_call.1} parent=0
    _
  %s8 = ssub.s32 1, %s6
  %s9 = scalar_select 0, %s8, %s6
  $region1: #{tpu_custom_call.1} parent=0
    #allocation5 [shape = 'u8[65536]{0}', space=vmem, size = 0x10000, scoped, tag = 'output window, operand 0, single buffered']
    #allocation6 [shape = 's32[1]{0}', space=sflag, size = 0x4, scoped, tag = 'scoped memory for tpu_custom_call.1']
    #allocation7 [shape = 'u8[4096]{0}', space=vmem, size = 0x1000, scoped, tag = 'output window, operand 1, single buffered']
    #allocation8 [shape = 's32[1]{0}', space=sflag, size = 0x4, scoped, tag = 'scoped memory for tpu_custom_call.1']
    #allocation9 [shape = 'u8[4096]{0}', space=vmem, size = 0x1000, scoped, tag = 'output window, operand 2, single buffered']
    %10 = vsyncpa [#allocation6], 0
    %11 = vsyncpa [#allocation8], 0
    // Predicated region
    $region2: #{tpu_custom_call.1} parent=1 // pred_check
      _
    $region3: #{tpu_custom_call.1} parent=1 // pred_check_branch
      %13 = sbr.rel (0) target = $region5
    $region4: #{tpu_custom_call.1} parent=1 // pred_region
      _
    $region5: #{tpu_custom_call.1} parent=1 // pred_fallthru
      _
    // Predicated region
    $region6: #{tpu_custom_call.1} parent=1 // pred_check
      _
    $region7: #{tpu_custom_call.1} parent=1 // pred_check_branch
      %15 = sbr.rel (0) target = $region9
    $region8: #{tpu_custom_call.1} parent=1 // pred_region
      _
    $region9: #{tpu_custom_call.1} parent=1 // pred_fallthru
      _
    %p17 = scmp.eq.s32.totalorder 0, 0
    // Predicated region
    $region10: #{tpu_custom_call.1} parent=1 // pred_check
      %p18 = pneg %p17
    $region11: #{tpu_custom_call.1} parent=1 // pred_check_branch
      %20 = sbr.rel (%p18) target = $region13
    $region12: #{tpu_custom_call.1} parent=1 // pred_region
      %vm21 = vcmask 7168
      %22 = vst.msk [vmem:[#allocation2] sm:$0xff] %vm21, -1e+30
      %23 = vst.msk [vmem:[#allocation2 + $0x8] sm:$0xff] %vm21, -1e+30
      %24 = vst.msk [vmem:[#allocation2 + $0x10] sm:$0xff] %vm21, -1e+30
      %25 = vst.msk [vmem:[#allocation2 + $0x18] sm:$0xff] %vm21, -1e+30
      %26 = vst.msk [vmem:[#allocation2 + $0x20] sm:$0xff] %vm21, -1e+30
      %27 = vst.msk [vmem:[#allocation2 + $0x28] sm:$0xff] %vm21, -1e+30
      %28 = vst.msk [vmem:[#allocation2 + $0x30] sm:$0xff] %vm21, -1e+30
      %29 = vst.msk [vmem:[#allocation2 + $0x38] sm:$0xff] %vm21, -1e+30
      %30 = vst.msk [vmem:[#allocation2 + $0x40] sm:$0xff] %vm21, -1e+30
      %31 = vst.msk [vmem:[#allocation2 + $0x48] sm:$0xff] %vm21, -1e+30
      %32 = vst.msk [vmem:[#allocation2 + $0x50] sm:$0xff] %vm21, -1e+30
      %33 = vst.msk [vmem:[#allocation2 + $0x58] sm:$0xff] %vm21, -1e+30
      %34 = vst.msk [vmem:[#allocation2 + $0x60] sm:$0xff] %vm21, -1e+30
      %35 = vst.msk [vmem:[#allocation2 + $0x68] sm:$0xff] %vm21, -1e+30
      %36 = vst.msk [vmem:[#allocation2 + $0x70] sm:$0xff] %vm21, -1e+30
      %37 = vst.msk [vmem:[#allocation2 + $0x78] sm:$0xff] %vm21, -1e+30
      %38 = vst.msk [vmem:[#allocation3] sm:$0xff] %vm21, 0.0
      %39 = vst.msk [vmem:[#allocation3 + $0x8] sm:$0xff] %vm21, 0.0
      %40 = vst.msk [vmem:[#allocation3 + $0x10] sm:$0xff] %vm21, 0.0
      %41 = vst.msk [vmem:[#allocation3 + $0x18] sm:$0xff] %vm21, 0.0
      %42 = vst.msk [vmem:[#allocation3 + $0x20] sm:$0xff] %vm21, 0.0
      %43 = vst.msk [vmem:[#allocation3 + $0x28] sm:$0xff] %vm21, 0.0
      %44 = vst.msk [vmem:[#allocation3 + $0x30] sm:$0xff] %vm21, 0.0
      %45 = vst.msk [vmem:[#allocation3 + $0x38] sm:$0xff] %vm21, 0.0
      %46 = vst.msk [vmem:[#allocation3 + $0x40] sm:$0xff] %vm21, 0.0
      %47 = vst.msk [vmem:[#allocation3 + $0x48] sm:$0xff] %vm21, 0.0
      %48 = vst.msk [vmem:[#allocation3 + $0x50] sm:$0xff] %vm21, 0.0
      %49 = vst.msk [vmem:[#allocation3 + $0x58] sm:$0xff] %vm21, 0.0
      %50 = vst.msk [vmem:[#allocation3 + $0x60] sm:$0xff] %vm21, 0.0
      %51 = vst.msk [vmem:[#allocation3 + $0x68] sm:$0xff] %vm21, 0.0
      %52 = vst.msk [vmem:[#allocation3 + $0x70] sm:$0xff] %vm21, 0.0
      %53 = vst.msk [vmem:[#allocation3 + $0x78] sm:$0xff] %vm21, 0.0
      %54 = vst.msk [vmem:[#allocation4] sm:$0xff] %vm21, 0.0
      %55 = vst.msk [vmem:[#allocation4 + $0x8] sm:$0xff] %vm21, 0.0
      %56 = vst.msk [vmem:[#allocation4 + $0x10] sm:$0xff] %vm21, 0.0
      %57 = vst.msk [vmem:[#allocation4 + $0x18] sm:$0xff] %vm21, 0.0
      %58 = vst.msk [vmem:[#allocation4 + $0x20] sm:$0xff] %vm21, 0.0
      %59 = vst.msk [vmem:[#allocation4 + $0x28] sm:$0xff] %vm21, 0.0
      %60 = vst.msk [vmem:[#allocation4 + $0x30] sm:$0xff] %vm21, 0.0
      %61 = vst.msk [vmem:[#allocation4 + $0x38] sm:$0xff] %vm21, 0.0
      %62 = vst.msk [vmem:[#allocation4 + $0x40] sm:$0xff] %vm21, 0.0
      %63 = vst.msk [vmem:[#allocation4 + $0x48] sm:$0xff] %vm21, 0.0
      %64 = vst.msk [vmem:[#allocation4 + $0x50] sm:$0xff] %vm21, 0.0
      %65 = vst.msk [vmem:[#allocation4 + $0x58] sm:$0xff] %vm21, 0.0
      %66 = vst.msk [vmem:[#allocation4 + $0x60] sm:$0xff] %vm21, 0.0
      %67 = vst.msk [vmem:[#allocation4 + $0x68] sm:$0xff] %vm21, 0.0
      %68 = vst.msk [vmem:[#allocation4 + $0x70] sm:$0xff] %vm21, 0.0
      %69 = vst.msk [vmem:[#allocation4 + $0x78] sm:$0xff] %vm21, 0.0
    $region13: #{tpu_custom_call.1} parent=1 // pred_fallthru
      _
    %v70 = vld [vmem:[%s0] sm:$0xf]
    %v71 = vld [vmem:[%s0 + $0x4] sm:$0xf]
    %v72 = vld [vmem:[%s0 + $0x8] sm:$0xf]
    %v73 = vld [vmem:[%s0 + $0xc] sm:$0xf]
    %v74 = vld [vmem:[%s0 + $0x10] sm:$0xf]
    %v75 = vld [vmem:[%s0 + $0x14] sm:$0xf]
    %v76 = vld [vmem:[%s0 + $0x18] sm:$0xf]
    %v77 = vld [vmem:[%s0 + $0x1c] sm:$0xf]
    %v78 = vld [vmem:[%s0 + $0x20] sm:$0xf]
    %v79 = vld [vmem:[%s0 + $0x24] sm:$0xf]
    %v80 = vld [vmem:[%s0 + $0x28] sm:$0xf]
    %v81 = vld [vmem:[%s0 + $0x2c] sm:$0xf]
    %v82 = vld [vmem:[%s0 + $0x30] sm:$0xf]
    %v83 = vld [vmem:[%s0 + $0x34] sm:$0xf]
    %v84 = vld [vmem:[%s0 + $0x38] sm:$0xf]
    %v85 = vld [vmem:[%s0 + $0x3c] sm:$0xf]
    %v86 = vld [vmem:[%s1] sm:$0xf]
    %v87 = vld [vmem:[%s1 + $0x4] sm:$0xf]
    %v88 = vld [vmem:[%s1 + $0x8] sm:$0xf]
    %v89 = vld [vmem:[%s1 + $0xc] sm:$0xf]
    %v90 = vld [vmem:[%s1 + $0x10] sm:$0xf]
    %v91 = vld [vmem:[%s1 + $0x14] sm:$0xf]
    %v92 = vld [vmem:[%s1 + $0x18] sm:$0xf]
    %v93 = vld [vmem:[%s1 + $0x1c] sm:$0xf]
    %v94 = vld [vmem:[%s1 + $0x20] sm:$0xf]
    %v95 = vld [vmem:[%s1 + $0x24] sm:$0xf]
    %v96 = vld [vmem:[%s1 + $0x28] sm:$0xf]
    %v97 = vld [vmem:[%s1 + $0x2c] sm:$0xf]
    %v98 = vld [vmem:[%s1 + $0x30] sm:$0xf]
    %v99 = vld [vmem:[%s1 + $0x34] sm:$0xf]
    %v100 = vld [vmem:[%s1 + $0x38] sm:$0xf]
    %v101 = vld [vmem:[%s1 + $0x3c] sm:$0xf]
    %v118 = vunpack.c.l.b16 %v70
    %v119 = vunpack.c.l.b16 %v71
    %v120 = vunpack.c.l.b16 %v72
    %v121 = vunpack.c.l.b16 %v73
    %v122 = vunpack.c.l.b16 %v74
    %v123 = vunpack.c.l.b16 %v75
    %v124 = vunpack.c.l.b16 %v76
    %v125 = vunpack.c.l.b16 %v77
    %v126 = vunpack.c.l.b16 %v78
    %v127 = vunpack.c.l.b16 %v79
    %v128 = vunpack.c.l.b16 %v80
    %v129 = vunpack.c.l.b16 %v81
    %v130 = vunpack.c.l.b16 %v82
    %v131 = vunpack.c.l.b16 %v83
    %v132 = vunpack.c.l.b16 %v84
    %v133 = vunpack.c.l.b16 %v85
    %v134 = vpack.c.b16 %v119, %v118
    %v135 = vpack.c.b16 %v121, %v120
    %v136 = vpack.c.b16 %v123, %v122
    %v137 = vpack.c.b16 %v125, %v124
    %v138 = vpack.c.b16 %v127, %v126
    %v139 = vpack.c.b16 %v129, %v128
    %v140 = vpack.c.b16 %v131, %v130
    %v141 = vpack.c.b16 %v133, %v132
    %v158 = vunpack.c.l.b16 %v86
    %v159 = vunpack.c.l.b16 %v87
    %v160 = vunpack.c.l.b16 %v88
    %v161 = vunpack.c.l.b16 %v89
    %v162 = vunpack.c.l.b16 %v90
    %v163 = vunpack.c.l.b16 %v91
    %v164 = vunpack.c.l.b16 %v92
    %v165 = vunpack.c.l.b16 %v93
    %v166 = vunpack.c.l.b16 %v94
    %v167 = vunpack.c.l.b16 %v95
    %v168 = vunpack.c.l.b16 %v96
    %v169 = vunpack.c.l.b16 %v97
    %v170 = vunpack.c.l.b16 %v98
    %v171 = vunpack.c.l.b16 %v99
    %v172 = vunpack.c.l.b16 %v100
    %v173 = vunpack.c.l.b16 %v101
    %v174 = vpack.c.b16 %v159, %v158
    %v175 = vpack.c.b16 %v161, %v160
    %v176 = vpack.c.b16 %v163, %v162
    %v177 = vpack.c.b16 %v165, %v164
    %v178 = vpack.c.b16 %v167, %v166
    %v179 = vpack.c.b16 %v169, %v168
    %v180 = vpack.c.b16 %v171, %v170
    %v181 = vpack.c.b16 %v173, %v172
    %vm182 = vcmask 261120
    %v184 = vsel %vm182, %v134, 0
    %v187 = vsel %vm182, %v135, 0
    %v190 = vsel %vm182, %v136, 0
    %v193 = vsel %vm182, %v137, 0
    %v196 = vsel %vm182, %v138, 0
    %v199 = vsel %vm182, %v139, 0
    %v202 = vsel %vm182, %v140, 0
    %v205 = vsel %vm182, %v141, 0
    %v208 = vsel %vm182, %v174, 0
    %v211 = vsel %vm182, %v175, 0
    %v214 = vsel %vm182, %v176, 0
    %v217 = vsel %vm182, %v177, 0
    %v220 = vsel %vm182, %v178, 0
    %v223 = vsel %vm182, %v179, 0
    %v226 = vsel %vm182, %v180, 0
    %v229 = vsel %vm182, %v181, 0
    %231 = vmatprep.subr.bf16.mxu0 0
    %232 = vmatpush1.bf16.xpose.msra.mxu0 %v208
    %233 = vmatprep.subr.bf16.mxu0 0
    %234 = vmatpush1.bf16.xpose.msra.mxu0 %v211
    %235 = vmatprep.subr.bf16.mxu0 0
    %236 = vmatpush1.bf16.xpose.msra.mxu0 %v214
    %237 = vmatprep.subr.bf16.mxu0 0
    %238 = vmatpush1.bf16.xpose.msra.mxu0 %v217
    %239 = vmatprep.subr.bf16.mxu0 0
    %240 = vmatpush1.bf16.xpose.msra.mxu0 %v220
    %241 = vmatprep.subr.bf16.mxu0 0
    %242 = vmatpush1.bf16.xpose.msra.mxu0 %v223
    %243 = vmatprep.subr.bf16.mxu0 0
    %244 = vmatpush1.bf16.xpose.msra.mxu0 %v226
    %245 = vmatprep.subr.bf16.mxu0 0
    %246 = vmatpush1.bf16.xpose.msra.mxu0 %v229
    %247 = vmatprep.subr.bf16.mxu0 0
    %248 = vmatpush1.bf16.xpose.msra.mxu0 0
    %249 = vmatprep.subr.bf16.mxu0 0
    %250 = vmatpush1.bf16.xpose.msra.mxu0 0
    %251 = vmatprep.subr.bf16.mxu0 0
    %252 = vmatpush1.bf16.xpose.msra.mxu0 0
    %253 = vmatprep.subr.bf16.mxu0 0
    %254 = vmatpush1.bf16.xpose.msra.mxu0 0
    %255 = vmatprep.subr.bf16.mxu0 0
    %256 = vmatpush1.bf16.xpose.msra.mxu0 0
    %257 = vmatprep.subr.bf16.mxu0 0
    %258 = vmatpush1.bf16.xpose.msra.mxu0 0
    %259 = vmatprep.subr.bf16.mxu0 0
    %260 = vmatpush1.bf16.xpose.msra.mxu0 0
    %261 = vmatprep.subr.bf16.mxu0 0
    %262 = vmatpush1.bf16.xpose.msra.mxu0 0
    %263 = vmatprep.mubr.bf16.mxu0 0
    %264 = vmatmul.mubr.bf16.gmra.mrb[0].mxu0 %v184
    %v265 = vpop.f32.mrb[0].mxu0
    %v266 = vadd.f32 0.0, %v265
    %v267 = vpop.f32.mrb[0].mxu0
    %v268 = vpop.f32.mrb[0].mxu0
    %v269 = vadd.f32 0.0, %v268
    %v270 = vpop.f32.mrb[0].mxu0
    %271 = vmatprep.mubr.bf16.mxu0 0
    %272 = vmatmul.mubr.bf16.gmra.mrb[0].mxu0 %v187
    %v273 = vpop.f32.mrb[0].mxu0
    %v274 = vadd.f32 0.0, %v273
    %v275 = vpop.f32.mrb[0].mxu0
    %v276 = vpop.f32.mrb[0].mxu0
    %v277 = vadd.f32 0.0, %v276
    %v278 = vpop.f32.mrb[0].mxu0
    %279 = vmatprep.mubr.bf16.mxu0 0
    %280 = vmatmul.mubr.bf16.gmra.mrb[0].mxu0 %v190
    %v281 = vpop.f32.mrb[0].mxu0
    %v282 = vadd.f32 0.0, %v281
    %v283 = vpop.f32.mrb[0].mxu0
    %v284 = vpop.f32.mrb[0].mxu0
    %v285 = vadd.f32 0.0, %v284
    %v286 = vpop.f32.mrb[0].mxu0
    %287 = vmatprep.mubr.bf16.mxu0 0
    %288 = vmatmul.mubr.bf16.gmra.mrb[0].mxu0 %v193
    %v289 = vpop.f32.mrb[0].mxu0
    %v290 = vadd.f32 0.0, %v289
    %v291 = vpop.f32.mrb[0].mxu0
    %v292 = vpop.f32.mrb[0].mxu0
    %v293 = vadd.f32 0.0, %v292
    %v294 = vpop.f32.mrb[0].mxu0
    %295 = vmatprep.mubr.bf16.mxu0 0
    %296 = vmatmul.mubr.bf16.gmra.mrb[0].mxu0 %v196
    %v297 = vpop.f32.mrb[0].mxu0
    %v298 = vadd.f32 0.0, %v297
    %v299 = vpop.f32.mrb[0].mxu0
    %v300 = vpop.f32.mrb[0].mxu0
    %v301 = vadd.f32 0.0, %v300
    %v302 = vpop.f32.mrb[0].mxu0
    %303 = vmatprep.mubr.bf16.mxu0 0
    %304 = vmatmul.mubr.bf16.gmra.mrb[0].mxu0 %v199
    %v305 = vpop.f32.mrb[0].mxu0
    %v306 = vadd.f32 0.0, %v305
    %v307 = vpop.f32.mrb[0].mxu0
    %v308 = vpop.f32.mrb[0].mxu0
    %v309 = vadd.f32 0.0, %v308
    %v310 = vpop.f32.mrb[0].mxu0
    %311 = vmatprep.mubr.bf16.mxu0 0
    %312 = vmatmul.mubr.bf16.gmra.mrb[0].mxu0 %v202
    %v313 = vpop.f32.mrb[0].mxu0
    %v314 = vadd.f32 0.0, %v313
    %v315 = vpop.f32.mrb[0].mxu0
    %v316 = vpop.f32.mrb[0].mxu0
    %v317 = vadd.f32 0.0, %v316
    %v318 = vpop.f32.mrb[0].mxu0
    %319 = vmatprep.mubr.bf16.mxu0 0
    %320 = vmatmul.mubr.bf16.gmra.mrb[0].mxu0 %v205
    %v321 = vpop.f32.mrb[0].mxu0
    %v322 = vadd.f32 0.0, %v321
    %v323 = vpop.f32.mrb[0].mxu0
    %v324 = vpop.f32.mrb[0].mxu0
    %v325 = vadd.f32 0.0, %v324
    %v326 = vpop.f32.mrb[0].mxu0
    %327 = vdwg.mxu0
    %v328 = vmul.f32 %v266, 14.285714
    %v329 = vmul.f32 %v269, 14.285714
    %v330 = vmul.f32 %v274, 14.285714
    %v331 = vmul.f32 %v277, 14.285714
    %v332 = vmul.f32 %v282, 14.285714
    %v333 = vmul.f32 %v285, 14.285714
    %v334 = vmul.f32 %v290, 14.285714
    %v335 = vmul.f32 %v293, 14.285714
    %v336 = vmul.f32 %v298, 14.285714
    %v337 = vmul.f32 %v301, 14.285714
    %v338 = vmul.f32 %v306, 14.285714
    %v339 = vmul.f32 %v309, 14.285714
    %v340 = vmul.f32 %v314, 14.285714
    %v341 = vmul.f32 %v317, 14.285714
    %v342 = vmul.f32 %v322, 14.285714
    %v343 = vmul.f32 %v325, 14.285714
    %s344 = smul.u32 0, 128
    %v345 = vlaneseq
    %v346 = vand.u32 %v345, 127
    %v347 = vstv %s344
    %v348 = vadd.s32 %v347, %v346
    %s349 = smul.u32 0, 128
    %v350 = vlaneseq
    %v351 = vshrl.u32 %v350, 7
    %v352 = vadd.s32 %v351, 8
    %v353 = vadd.s32 %v351, 16
    %v354 = vadd.s32 %v351, 24
    %v355 = vadd.s32 %v351, 32
    %v356 = vadd.s32 %v351, 40
    %v357 = vadd.s32 %v351, 48
    %v358 = vadd.s32 %v351, 56
    %v359 = vadd.s32 %v351, 64
    %v360 = vadd.s32 %v351, 72
    %v361 = vadd.s32 %v351, 80
    %v362 = vadd.s32 %v351, 88
    %v363 = vadd.s32 %v351, 96
    %v364 = vadd.s32 %v351, 104
    %v365 = vadd.s32 %v351, 112
    %v366 = vadd.s32 %v351, 120
    %v367 = vstv %s349
    %v368 = vadd.s32 %v367, %v351
    %v369 = vadd.s32 %v367, %v352
    %v370 = vadd.s32 %v367, %v353
    %v371 = vadd.s32 %v367, %v354
    %v372 = vadd.s32 %v367, %v355
    %v373 = vadd.s32 %v367, %v356
    %v374 = vadd.s32 %v367, %v357
    %v375 = vadd.s32 %v367, %v358
    %v376 = vadd.s32 %v367, %v359
    %v377 = vadd.s32 %v367, %v360
    %v378 = vadd.s32 %v367, %v361
    %v379 = vadd.s32 %v367, %v362
    %v380 = vadd.s32 %v367, %v363
    %v381 = vadd.s32 %v367, %v364
    %v382 = vadd.s32 %v367, %v365
    %v383 = vadd.s32 %v367, %v366
    %vm384 = vcmp.lt.s32.totalorder %v348, 8
    %v385 = vsel %vm384, %v328, -1e+30
    %v386 = vsel %vm384, %v329, -1e+30
    %v387 = vsel %vm384, %v330, -1e+30
    %v388 = vsel %vm384, %v331, -1e+30
    %v389 = vsel %vm384, %v332, -1e+30
    %v390 = vsel %vm384, %v333, -1e+30
    %v391 = vsel %vm384, %v334, -1e+30
    %v392 = vsel %vm384, %v335, -1e+30
    %v393 = vsel %vm384, %v336, -1e+30
    %v394 = vsel %vm384, %v337, -1e+30
    %v395 = vsel %vm384, %v338, -1e+30
    %v396 = vsel %vm384, %v339, -1e+30
    %v397 = vsel %vm384, %v340, -1e+30
    %v398 = vsel %vm384, %v341, -1e+30
    %v399 = vsel %vm384, %v342, -1e+30
    %v400 = vsel %vm384, %v343, -1e+30
    %vm401 = vcmp.lt.s32.totalorder %v368, 8
    %vm402 = vcmp.lt.s32.totalorder %v369, 8
    %vm403 = vcmp.lt.s32.totalorder %v370, 8
    %vm404 = vcmp.lt.s32.totalorder %v371, 8
    %vm405 = vcmp.lt.s32.totalorder %v372, 8
    %vm406 = vcmp.lt.s32.totalorder %v373, 8
    %vm407 = vcmp.lt.s32.totalorder %v374, 8
    %vm408 = vcmp.lt.s32.totalorder %v375, 8
    %vm409 = vcmp.lt.s32.totalorder %v376, 8
    %vm410 = vcmp.lt.s32.totalorder %v377, 8
    %vm411 = vcmp.lt.s32.totalorder %v378, 8
    %vm412 = vcmp.lt.s32.totalorder %v379, 8
    %vm413 = vcmp.lt.s32.totalorder %v380, 8
    %vm414 = vcmp.lt.s32.totalorder %v381, 8
    %vm415 = vcmp.lt.s32.totalorder %v382, 8
    %vm416 = vcmp.lt.s32.totalorder %v383, 8
    %v417 = vsel %vm401, %v328, -1e+30
    %v418 = vsel %vm402, %v329, -1e+30
    %v419 = vsel %vm403, %v330, -1e+30
    %v420 = vsel %vm404, %v331, -1e+30
    %v421 = vsel %vm405, %v332, -1e+30
    %v422 = vsel %vm406, %v333, -1e+30
    %v423 = vsel %vm407, %v334, -1e+30
    %v424 = vsel %vm408, %v335, -1e+30
    %v425 = vsel %vm409, %v336, -1e+30
    %v426 = vsel %vm410, %v337, -1e+30
    %v427 = vsel %vm411, %v338, -1e+30
    %v428 = vsel %vm412, %v339, -1e+30
    %v429 = vsel %vm413, %v340, -1e+30
    %v430 = vsel %vm414, %v341, -1e+30
    %v431 = vsel %vm415, %v342, -1e+30
    %v432 = vsel %vm416, %v343, -1e+30
    %v433 = vld [vmem:[#allocation2] sm:$0xff]
    %v434 = vld [vmem:[#allocation2 + $0x8] sm:$0xff]
    %v435 = vld [vmem:[#allocation2 + $0x10] sm:$0xff]
    %v436 = vld [vmem:[#allocation2 + $0x18] sm:$0xff]
    %v437 = vld [vmem:[#allocation2 + $0x20] sm:$0xff]
    %v438 = vld [vmem:[#allocation2 + $0x28] sm:$0xff]
    %v439 = vld [vmem:[#allocation2 + $0x30] sm:$0xff]
    %v440 = vld [vmem:[#allocation2 + $0x38] sm:$0xff]
    %v441 = vld [vmem:[#allocation2 + $0x40] sm:$0xff]
    %v442 = vld [vmem:[#allocation2 + $0x48] sm:$0xff]
    %v443 = vld [vmem:[#allocation2 + $0x50] sm:$0xff]
    %v444 = vld [vmem:[#allocation2 + $0x58] sm:$0xff]
    %v445 = vld [vmem:[#allocation2 + $0x60] sm:$0xff]
    %v446 = vld [vmem:[#allocation2 + $0x68] sm:$0xff]
    %v447 = vld [vmem:[#allocation2 + $0x70] sm:$0xff]
    %v448 = vld [vmem:[#allocation2 + $0x78] sm:$0xff]
    %449 = vmax.xlane.f32.xlu0 %v385
    %v450 = vpop.xlane.xlu0 %449
    %451 = vmax.xlane.f32.xlu0 %v386
    %v452 = vpop.xlane.xlu0 %451
    %453 = vmax.xlane.f32.xlu0 %v387
    %v454 = vpop.xlane.xlu0 %453
    %455 = vmax.xlane.f32.xlu0 %v388
    %v456 = vpop.xlane.xlu0 %455
    %457 = vmax.xlane.f32.xlu0 %v389
    %v458 = vpop.xlane.xlu0 %457
    %459 = vmax.xlane.f32.xlu0 %v390
    %v460 = vpop.xlane.xlu0 %459
    %461 = vmax.xlane.f32.xlu0 %v391
    %v462 = vpop.xlane.xlu0 %461
    %463 = vmax.xlane.f32.xlu0 %v392
    %v464 = vpop.xlane.xlu0 %463
    %465 = vmax.xlane.f32.xlu0 %v393
    %v466 = vpop.xlane.xlu0 %465
    %467 = vmax.xlane.f32.xlu0 %v394
    %v468 = vpop.xlane.xlu0 %467
    %469 = vmax.xlane.f32.xlu0 %v395
    %v470 = vpop.xlane.xlu0 %469
    %471 = vmax.xlane.f32.xlu0 %v396
    %v472 = vpop.xlane.xlu0 %471
    %473 = vmax.xlane.f32.xlu0 %v397
    %v474 = vpop.xlane.xlu0 %473
    %475 = vmax.xlane.f32.xlu0 %v398
    %v476 = vpop.xlane.xlu0 %475
    %477 = vmax.xlane.f32.xlu0 %v399
    %v478 = vpop.xlane.xlu0 %477
    %479 = vmax.xlane.f32.xlu0 %v400
    %v480 = vpop.xlane.xlu0 %479
    %v481 = vmax.f32 %v433, %v450
    %v482 = vmax.f32 %v434, %v452
    %v483 = vmax.f32 %v435, %v454
    %v484 = vmax.f32 %v436, %v456
    %v485 = vmax.f32 %v437, %v458
    %v486 = vmax.f32 %v438, %v460
    %v487 = vmax.f32 %v439, %v462
    %v488 = vmax.f32 %v440, %v464
    %v489 = vmax.f32 %v441, %v466
    %v490 = vmax.f32 %v442, %v468
    %v491 = vmax.f32 %v443, %v470
    %v492 = vmax.f32 %v444, %v472
    %v493 = vmax.f32 %v445, %v474
    %v494 = vmax.f32 %v446, %v476
    %v495 = vmax.f32 %v447, %v478
    %v496 = vmax.f32 %v448, %v480
    %v497 = vsub.f32 %v433, %v481
    %v498 = vsub.f32 %v434, %v482
    %v499 = vsub.f32 %v435, %v483
    %v500 = vsub.f32 %v436, %v484
    %v501 = vsub.f32 %v437, %v485
    %v502 = vsub.f32 %v438, %v486
    %v503 = vsub.f32 %v439, %v487
    %v504 = vsub.f32 %v440, %v488
    %v505 = vsub.f32 %v441, %v489
    %v506 = vsub.f32 %v442, %v490
    %v507 = vsub.f32 %v443, %v491
    %v508 = vsub.f32 %v444, %v492
    %v509 = vsub.f32 %v445, %v493
    %v510 = vsub.f32 %v446, %v494
    %v511 = vsub.f32 %v447, %v495
    %v512 = vsub.f32 %v448, %v496
    %v513 = vmul.f32 %v497, 1.442695
    %v514 = vpow.pop %v513
    %v515 = vmul.f32 %v498, 1.442695
    %v516 = vpow.pop %v515
    %v517 = vmul.f32 %v499, 1.442695
    %v518 = vpow.pop %v517
    %v519 = vmul.f32 %v500, 1.442695
    %v520 = vpow.pop %v519
    %v521 = vmul.f32 %v501, 1.442695
    %v522 = vpow.pop %v521
    %v523 = vmul.f32 %v502, 1.442695
    %v524 = vpow.pop %v523
    %v525 = vmul.f32 %v503, 1.442695
    %v526 = vpow.pop %v525
    %v527 = vmul.f32 %v504, 1.442695
    %v528 = vpow.pop %v527
    %v529 = vmul.f32 %v505, 1.442695
    %v530 = vpow.pop %v529
    %v531 = vmul.f32 %v506, 1.442695
    %v532 = vpow.pop %v531
    %v533 = vmul.f32 %v507, 1.442695
    %v534 = vpow.pop %v533
    %v535 = vmul.f32 %v508, 1.442695
    %v536 = vpow.pop %v535
    %v537 = vmul.f32 %v509, 1.442695
    %v538 = vpow.pop %v537
    %v539 = vmul.f32 %v510, 1.442695
    %v540 = vpow.pop %v539
    %v541 = vmul.f32 %v511, 1.442695
    %v542 = vpow.pop %v541
    %v543 = vmul.f32 %v512, 1.442695
    %v544 = vpow.pop %v543
    %v545 = vld [vmem:[#allocation3] sm:$0xff]
    %v546 = vld [vmem:[#allocation3 + $0x8] sm:$0xff]
    %v547 = vld [vmem:[#allocation3 + $0x10] sm:$0xff]
    %v548 = vld [vmem:[#allocation3 + $0x18] sm:$0xff]
    %v549 = vld [vmem:[#allocation3 + $0x20] sm:$0xff]
    %v550 = vld [vmem:[#allocation3 + $0x28] sm:$0xff]
    %v551 = vld [vmem:[#allocation3 + $0x30] sm:$0xff]
    %v552 = vld [vmem:[#allocation3 + $0x38] sm:$0xff]
    %v553 = vld [vmem:[#allocation3 + $0x40] sm:$0xff]
    %v554 = vld [vmem:[#allocation3 + $0x48] sm:$0xff]
    %v555 = vld [vmem:[#allocation3 + $0x50] sm:$0xff]
    %v556 = vld [vmem:[#allocation3 + $0x58] sm:$0xff]
    %v557 = vld [vmem:[#allocation3 + $0x60] sm:$0xff]
    %v558 = vld [vmem:[#allocation3 + $0x68] sm:$0xff]
    %v559 = vld [vmem:[#allocation3 + $0x70] sm:$0xff]
    %v560 = vld [vmem:[#allocation3 + $0x78] sm:$0xff]
    %v561 = vmul.f32 %v514, %v545
    %v562 = vmul.f32 %v516, %v546
    %v563 = vmul.f32 %v518, %v547
    %v564 = vmul.f32 %v520, %v548
    %v565 = vmul.f32 %v522, %v549
    %v566 = vmul.f32 %v524, %v550
    %v567 = vmul.f32 %v526, %v551
    %v568 = vmul.f32 %v528, %v552
    %v569 = vmul.f32 %v530, %v553
    %v570 = vmul.f32 %v532, %v554
    %v571 = vmul.f32 %v534, %v555
    %v572 = vmul.f32 %v536, %v556
    %v573 = vmul.f32 %v538, %v557
    %v574 = vmul.f32 %v540, %v558
    %v575 = vmul.f32 %v542, %v559
    %v576 = vmul.f32 %v544, %v560
    %578 = vset.pattern.permute.xlu0 0
    %579 = vperm.xlu0 %578, %v481
    %v580 = vpop.permute.xlu0 %579
    %583 = vset.pattern.permute.xlu0 0
    %584 = vperm.xlu0 %583, %v482
    %v585 = vpop.permute.xlu0 %584
    %588 = vset.pattern.permute.xlu0 0
    %589 = vperm.xlu0 %588, %v483
    %v590 = vpop.permute.xlu0 %589
    %593 = vset.pattern.permute.xlu0 0
    %594 = vperm.xlu0 %593, %v484
    %v595 = vpop.permute.xlu0 %594
    %598 = vset.pattern.permute.xlu0 0
    %599 = vperm.xlu0 %598, %v485
    %v600 = vpop.permute.xlu0 %599
    %603 = vset.pattern.permute.xlu0 0
    %604 = vperm.xlu0 %603, %v486
    %v605 = vpop.permute.xlu0 %604
    %608 = vset.pattern.permute.xlu0 0
    %609 = vperm.xlu0 %608, %v487
    %v610 = vpop.permute.xlu0 %609
    %613 = vset.pattern.permute.xlu0 0
    %614 = vperm.xlu0 %613, %v488
    %v615 = vpop.permute.xlu0 %614
    %618 = vset.pattern.permute.xlu0 0
    %619 = vperm.xlu0 %618, %v489
    %v620 = vpop.permute.xlu0 %619
    %623 = vset.pattern.permute.xlu0 0
    %624 = vperm.xlu0 %623, %v490
    %v625 = vpop.permute.xlu0 %624
    %628 = vset.pattern.permute.xlu0 0
    %629 = vperm.xlu0 %628, %v491
    %v630 = vpop.permute.xlu0 %629
    %633 = vset.pattern.permute.xlu0 0
    %634 = vperm.xlu0 %633, %v492
    %v635 = vpop.permute.xlu0 %634
    %638 = vset.pattern.permute.xlu0 0
    %639 = vperm.xlu0 %638, %v493
    %v640 = vpop.permute.xlu0 %639
    %643 = vset.pattern.permute.xlu0 0
    %644 = vperm.xlu0 %643, %v494
    %v645 = vpop.permute.xlu0 %644
    %648 = vset.pattern.permute.xlu0 0
    %649 = vperm.xlu0 %648, %v495
    %v650 = vpop.permute.xlu0 %649
    %653 = vset.pattern.permute.xlu0 0
    %654 = vperm.xlu0 %653, %v496
    %v655 = vpop.permute.xlu0 %654
    %v657 = vsub.f32 %v385, %v580
    %v658 = vsub.f32 %v386, %v585
    %v659 = vsub.f32 %v387, %v590
    %v660 = vsub.f32 %v388, %v595
    %v661 = vsub.f32 %v389, %v600
    %v662 = vsub.f32 %v390, %v605
    %v663 = vsub.f32 %v391, %v610
    %v664 = vsub.f32 %v392, %v615
    %v665 = vsub.f32 %v393, %v620
    %v666 = vsub.f32 %v394, %v625
    %v667 = vsub.f32 %v395, %v630
    %v668 = vsub.f32 %v396, %v635
    %v669 = vsub.f32 %v397, %v640
    %v670 = vsub.f32 %v398, %v645
    %v671 = vsub.f32 %v399, %v650
    %v672 = vsub.f32 %v400, %v655
    %v673 = vmul.f32 %v657, 1.442695
    %v674 = vpow.pop %v673
    %v675 = vmul.f32 %v658, 1.442695
    %v676 = vpow.pop %v675
    %v677 = vmul.f32 %v659, 1.442695
    %v678 = vpow.pop %v677
    %v679 = vmul.f32 %v660, 1.442695
    %v680 = vpow.pop %v679
    %v681 = vmul.f32 %v661, 1.442695
    %v682 = vpow.pop %v681
    %v683 = vmul.f32 %v662, 1.442695
    %v684 = vpow.pop %v683
    %v685 = vmul.f32 %v663, 1.442695
    %v686 = vpow.pop %v685
    %v687 = vmul.f32 %v664, 1.442695
    %v688 = vpow.pop %v687
    %v689 = vmul.f32 %v665, 1.442695
    %v690 = vpow.pop %v689
    %v691 = vmul.f32 %v666, 1.442695
    %v692 = vpow.pop %v691
    %v693 = vmul.f32 %v667, 1.442695
    %v694 = vpow.pop %v693
    %v695 = vmul.f32 %v668, 1.442695
    %v696 = vpow.pop %v695
    %v697 = vmul.f32 %v669, 1.442695
    %v698 = vpow.pop %v697
    %v699 = vmul.f32 %v670, 1.442695
    %v700 = vpow.pop %v699
    %v701 = vmul.f32 %v671, 1.442695
    %v702 = vpow.pop %v701
    %v703 = vmul.f32 %v672, 1.442695
    %v704 = vpow.pop %v703
    %705 = vadd.xlane.f32.xlu0 %v674
    %v706 = vpop.xlane.xlu0 %705
    %707 = vadd.xlane.f32.xlu0 %v676
    %v708 = vpop.xlane.xlu0 %707
    %709 = vadd.xlane.f32.xlu0 %v678
    %v710 = vpop.xlane.xlu0 %709
    %711 = vadd.xlane.f32.xlu0 %v680
    %v712 = vpop.xlane.xlu0 %711
    %713 = vadd.xlane.f32.xlu0 %v682
    %v714 = vpop.xlane.xlu0 %713
    %715 = vadd.xlane.f32.xlu0 %v684
    %v716 = vpop.xlane.xlu0 %715
    %717 = vadd.xlane.f32.xlu0 %v686
    %v718 = vpop.xlane.xlu0 %717
    %719 = vadd.xlane.f32.xlu0 %v688
    %v720 = vpop.xlane.xlu0 %719
    %721 = vadd.xlane.f32.xlu0 %v690
    %v722 = vpop.xlane.xlu0 %721
    %723 = vadd.xlane.f32.xlu0 %v692
    %v724 = vpop.xlane.xlu0 %723
    %725 = vadd.xlane.f32.xlu0 %v694
    %v726 = vpop.xlane.xlu0 %725
    %727 = vadd.xlane.f32.xlu0 %v696
    %v728 = vpop.xlane.xlu0 %727
    %729 = vadd.xlane.f32.xlu0 %v698
    %v730 = vpop.xlane.xlu0 %729
    %731 = vadd.xlane.f32.xlu0 %v700
    %v732 = vpop.xlane.xlu0 %731
    %733 = vadd.xlane.f32.xlu0 %v702
    %v734 = vpop.xlane.xlu0 %733
    %735 = vadd.xlane.f32.xlu0 %v704
    %v736 = vpop.xlane.xlu0 %735
    %v737 = vadd.f32 %v561, %v706
    %v738 = vadd.f32 %v562, %v708
    %v739 = vadd.f32 %v563, %v710
    %v740 = vadd.f32 %v564, %v712
    %v741 = vadd.f32 %v565, %v714
    %v742 = vadd.f32 %v566, %v716
    %v743 = vadd.f32 %v567, %v718
    %v744 = vadd.f32 %v568, %v720
    %v745 = vadd.f32 %v569, %v722
    %v746 = vadd.f32 %v570, %v724
    %v747 = vadd.f32 %v571, %v726
    %v748 = vadd.f32 %v572, %v728
    %v749 = vadd.f32 %v573, %v730
    %v750 = vadd.f32 %v574, %v732
    %v751 = vadd.f32 %v575, %v734
    %v752 = vadd.f32 %v576, %v736
    %vm753 = vcmask 7168
    %754 = vst.msk [vmem:[#allocation3] sm:$0xff] %vm753, %v737
    %755 = vst.msk [vmem:[#allocation3 + $0x8] sm:$0xff] %vm753, %v738
    %756 = vst.msk [vmem:[#allocation3 + $0x10] sm:$0xff] %vm753, %v739
    %757 = vst.msk [vmem:[#allocation3 + $0x18] sm:$0xff] %vm753, %v740
    %758 = vst.msk [vmem:[#allocation3 + $0x20] sm:$0xff] %vm753, %v741
    %759 = vst.msk [vmem:[#allocation3 + $0x28] sm:$0xff] %vm753, %v742
    %760 = vst.msk [vmem:[#allocation3 + $0x30] sm:$0xff] %vm753, %v743
    %761 = vst.msk [vmem:[#allocation3 + $0x38] sm:$0xff] %vm753, %v744
    %762 = vst.msk [vmem:[#allocation3 + $0x40] sm:$0xff] %vm753, %v745
    %763 = vst.msk [vmem:[#allocation3 + $0x48] sm:$0xff] %vm753, %v746
    %764 = vst.msk [vmem:[#allocation3 + $0x50] sm:$0xff] %vm753, %v747
    %765 = vst.msk [vmem:[#allocation3 + $0x58] sm:$0xff] %vm753, %v748
    %766 = vst.msk [vmem:[#allocation3 + $0x60] sm:$0xff] %vm753, %v749
    %767 = vst.msk [vmem:[#allocation3 + $0x68] sm:$0xff] %vm753, %v750
    %768 = vst.msk [vmem:[#allocation3 + $0x70] sm:$0xff] %vm753, %v751
    %769 = vst.msk [vmem:[#allocation3 + $0x78] sm:$0xff] %vm753, %v752
    %770 = vst.msk [vmem:[#allocation2] sm:$0xff] %vm753, %v481
    %771 = vst.msk [vmem:[#allocation2 + $0x8] sm:$0xff] %vm753, %v482
    %772 = vst.msk [vmem:[#allocation2 + $0x10] sm:$0xff] %vm753, %v483
    %773 = vst.msk [vmem:[#allocation2 + $0x18] sm:$0xff] %vm753, %v484
    %774 = vst.msk [vmem:[#allocation2 + $0x20] sm:$0xff] %vm753, %v485
    %775 = vst.msk [vmem:[#allocation2 + $0x28] sm:$0xff] %vm753, %v486
    %776 = vst.msk [vmem:[#allocation2 + $0x30] sm:$0xff] %vm753, %v487
    %777 = vst.msk [vmem:[#allocation2 + $0x38] sm:$0xff] %vm753, %v488
    %778 = vst.msk [vmem:[#allocation2 + $0x40] sm:$0xff] %vm753, %v489
    %779 = vst.msk [vmem:[#allocation2 + $0x48] sm:$0xff] %vm753, %v490
    %780 = vst.msk [vmem:[#allocation2 + $0x50] sm:$0xff] %vm753, %v491
    %781 = vst.msk [vmem:[#allocation2 + $0x58] sm:$0xff] %vm753, %v492
    %782 = vst.msk [vmem:[#allocation2 + $0x60] sm:$0xff] %vm753, %v493
    %783 = vst.msk [vmem:[#allocation2 + $0x68] sm:$0xff] %vm753, %v494
    %784 = vst.msk [vmem:[#allocation2 + $0x70] sm:$0xff] %vm753, %v495
    %785 = vst.msk [vmem:[#allocation2 + $0x78] sm:$0xff] %vm753, %v496
    %p786 = scmp.eq.s32.totalorder 0, 0
    // Predicated region
    $region14: #{tpu_custom_call.1} parent=1 // pred_check
      %p787 = pneg %p786
    $region15: #{tpu_custom_call.1} parent=1 // pred_check_branch
      %789 = sbr.rel (%p787) target = $region17
    $region16: #{tpu_custom_call.1} parent=1 // pred_region
      %vm790 = vcmp.eq.s32.totalorder %v351, %v346
      %vm791 = vcmp.eq.s32.totalorder %v352, %v346
      %vm792 = vcmp.eq.s32.totalorder %v353, %v346
      %vm793 = vcmp.eq.s32.totalorder %v354, %v346
      %vm794 = vcmp.eq.s32.totalorder %v355, %v346
      %vm795 = vcmp.eq.s32.totalorder %v356, %v346
      %vm796 = vcmp.eq.s32.totalorder %v357, %v346
      %vm797 = vcmp.eq.s32.totalorder %v358, %v346
      %vm798 = vcmp.eq.s32.totalorder %v359, %v346
      %vm799 = vcmp.eq.s32.totalorder %v360, %v346
      %vm800 = vcmp.eq.s32.totalorder %v361, %v346
      %vm801 = vcmp.eq.s32.totalorder %v362, %v346
      %vm802 = vcmp.eq.s32.totalorder %v363, %v346
      %vm803 = vcmp.eq.s32.totalorder %v364, %v346
      %vm804 = vcmp.eq.s32.totalorder %v365, %v346
      %vm805 = vcmp.eq.s32.totalorder %v366, %v346
      %v806 = vsel %vm790, %v385, 0.0
      %v807 = vsel %vm791, %v386, 0.0
      %v808 = vsel %vm792, %v387, 0.0
      %v809 = vsel %vm793, %v388, 0.0
      %v810 = vsel %vm794, %v389, 0.0
      %v811 = vsel %vm795, %v390, 0.0
      %v812 = vsel %vm796, %v391, 0.0
      %v813 = vsel %vm797, %v392, 0.0
      %v814 = vsel %vm798, %v393, 0.0
      %v815 = vsel %vm799, %v394, 0.0
      %v816 = vsel %vm800, %v395, 0.0
      %v817 = vsel %vm801, %v396, 0.0
      %v818 = vsel %vm802, %v397, 0.0
      %v819 = vsel %vm803, %v398, 0.0
      %v820 = vsel %vm804, %v399, 0.0
      %v821 = vsel %vm805, %v400, 0.0
      %822 = vadd.xlane.f32.xlu0 %v806
      %v823 = vpop.xlane.xlu0 %822
      %824 = vadd.xlane.f32.xlu0 %v807
      %v825 = vpop.xlane.xlu0 %824
      %826 = vadd.xlane.f32.xlu0 %v808
      %v827 = vpop.xlane.xlu0 %826
      %828 = vadd.xlane.f32.xlu0 %v809
      %v829 = vpop.xlane.xlu0 %828
      %830 = vadd.xlane.f32.xlu0 %v810
      %v831 = vpop.xlane.xlu0 %830
      %832 = vadd.xlane.f32.xlu0 %v811
      %v833 = vpop.xlane.xlu0 %832
      %834 = vadd.xlane.f32.xlu0 %v812
      %v835 = vpop.xlane.xlu0 %834
      %836 = vadd.xlane.f32.xlu0 %v813
      %v837 = vpop.xlane.xlu0 %836
      %838 = vadd.xlane.f32.xlu0 %v814
      %v839 = vpop.xlane.xlu0 %838
      %840 = vadd.xlane.f32.xlu0 %v815
      %v841 = vpop.xlane.xlu0 %840
      %842 = vadd.xlane.f32.xlu0 %v816
      %v843 = vpop.xlane.xlu0 %842
      %844 = vadd.xlane.f32.xlu0 %v817
      %v845 = vpop.xlane.xlu0 %844
      %846 = vadd.xlane.f32.xlu0 %v818
      %v847 = vpop.xlane.xlu0 %846
      %848 = vadd.xlane.f32.xlu0 %v819
      %v849 = vpop.xlane.xlu0 %848
      %850 = vadd.xlane.f32.xlu0 %v820
      %v851 = vpop.xlane.xlu0 %850
      %852 = vadd.xlane.f32.xlu0 %v821
      %v853 = vpop.xlane.xlu0 %852
      %854 = vst.msk [vmem:[#allocation4] sm:$0xff] %vm753, %v823
      %855 = vst.msk [vmem:[#allocation4 + $0x8] sm:$0xff] %vm753, %v825
      %856 = vst.msk [vmem:[#allocation4 + $0x10] sm:$0xff] %vm753, %v827
      %857 = vst.msk [vmem:[#allocation4 + $0x18] sm:$0xff] %vm753, %v829
      %858 = vst.msk [vmem:[#allocation4 + $0x20] sm:$0xff] %vm753, %v831
      %859 = vst.msk [vmem:[#allocation4 + $0x28] sm:$0xff] %vm753, %v833
      %860 = vst.msk [vmem:[#allocation4 + $0x30] sm:$0xff] %vm753, %v835
      %861 = vst.msk [vmem:[#allocation4 + $0x38] sm:$0xff] %vm753, %v837
      %862 = vst.msk [vmem:[#allocation4 + $0x40] sm:$0xff] %vm753, %v839
      %863 = vst.msk [vmem:[#allocation4 + $0x48] sm:$0xff] %vm753, %v841
      %864 = vst.msk [vmem:[#allocation4 + $0x50] sm:$0xff] %vm753, %v843
      %865 = vst.msk [vmem:[#allocation4 + $0x58] sm:$0xff] %vm753, %v845
      %866 = vst.msk [vmem:[#allocation4 + $0x60] sm:$0xff] %vm753, %v847
      %867 = vst.msk [vmem:[#allocation4 + $0x68] sm:$0xff] %vm753, %v849
      %868 = vst.msk [vmem:[#allocation4 + $0x70] sm:$0xff] %vm753, %v851
      %869 = vst.msk [vmem:[#allocation4 + $0x78] sm:$0xff] %vm753, %v853
    $region17: #{tpu_custom_call.1} parent=1 // pred_fallthru
      _
    %v870 = vmax.f32 %v417, %v421
    %v871 = vmax.f32 %v418, %v422
    %v872 = vmax.f32 %v419, %v423
    %v873 = vmax.f32 %v420, %v424
    %v874 = vmax.f32 %v870, %v425
    %v875 = vmax.f32 %v871, %v426
    %v876 = vmax.f32 %v872, %v427
    %v877 = vmax.f32 %v873, %v428
    %v878 = vmax.f32 %v874, %v429
    %v879 = vmax.f32 %v875, %v430
    %v880 = vmax.f32 %v876, %v431
    %v881 = vmax.f32 %v877, %v432
    %v882 = vmax.f32 %v878, %v879
    %v883 = vmax.f32 %v880, %v881
    %v884 = vmax.f32 %v882, %v883
    %v885 = vrot.slane %v884, 4
    %v886 = vmax.f32 %v884, %v885
    %v887 = vrot.slane %v886, 2
    %v888 = vmax.f32 %v886, %v887
    %v889 = vrot.slane %v888, 1
    %v890 = vmax.f32 %v888, %v889
    %v891 = vsub.f32 %v417, %v890
    %v892 = vsub.f32 %v418, %v890
    %v893 = vsub.f32 %v419, %v890
    %v894 = vsub.f32 %v420, %v890
    %v895 = vsub.f32 %v421, %v890
    %v896 = vsub.f32 %v422, %v890
    %v897 = vsub.f32 %v423, %v890
    %v898 = vsub.f32 %v424, %v890
    %v899 = vsub.f32 %v425, %v890
    %v900 = vsub.f32 %v426, %v890
    %v901 = vsub.f32 %v427, %v890
    %v902 = vsub.f32 %v428, %v890
    %v903 = vsub.f32 %v429, %v890
    %v904 = vsub.f32 %v430, %v890
    %v905 = vsub.f32 %v431, %v890
    %v906 = vsub.f32 %v432, %v890
    %v907 = vmul.f32 %v891, 1.442695
    %v908 = vpow.pop %v907
    %v909 = vmul.f32 %v892, 1.442695
    %v910 = vpow.pop %v909
    %v911 = vmul.f32 %v893, 1.442695
    %v912 = vpow.pop %v911
    %v913 = vmul.f32 %v894, 1.442695
    %v914 = vpow.pop %v913
    %v915 = vmul.f32 %v895, 1.442695
    %v916 = vpow.pop %v915
    %v917 = vmul.f32 %v896, 1.442695
    %v918 = vpow.pop %v917
    %v919 = vmul.f32 %v897, 1.442695
    %v920 = vpow.pop %v919
    %v921 = vmul.f32 %v898, 1.442695
    %v922 = vpow.pop %v921
    %v923 = vmul.f32 %v899, 1.442695
    %v924 = vpow.pop %v923
    %v925 = vmul.f32 %v900, 1.442695
    %v926 = vpow.pop %v925
    %v927 = vmul.f32 %v901, 1.442695
    %v928 = vpow.pop %v927
    %v929 = vmul.f32 %v902, 1.442695
    %v930 = vpow.pop %v929
    %v931 = vmul.f32 %v903, 1.442695
    %v932 = vpow.pop %v931
    %v933 = vmul.f32 %v904, 1.442695
    %v934 = vpow.pop %v933
    %v935 = vmul.f32 %v905, 1.442695
    %v936 = vpow.pop %v935
    %v937 = vmul.f32 %v906, 1.442695
    %v938 = vpow.pop %v937
    %v939 = vadd.f32 %v908, %v910
    %v940 = vadd.f32 %v939, %v912
    %v941 = vadd.f32 %v940, %v914
    %v942 = vadd.f32 %v941, %v916
    %v943 = vadd.f32 %v942, %v918
    %v944 = vadd.f32 %v943, %v920
    %v945 = vadd.f32 %v944, %v922
    %v946 = vadd.f32 %v945, %v924
    %v947 = vadd.f32 %v946, %v926
    %v948 = vadd.f32 %v947, %v928
    %v949 = vadd.f32 %v948, %v930
    %v950 = vadd.f32 %v949, %v932
    %v951 = vadd.f32 %v950, %v934
    %v952 = vadd.f32 %v951, %v936
    %v953 = vadd.f32 %v952, %v938
    %v954 = vrot.slane %v953, 4
    %v955 = vadd.f32 %v953, %v954
    %v956 = vrot.slane %v955, 2
    %v957 = vadd.f32 %v955, %v956
    %v958 = vrot.slane %v957, 1
    %v959 = vadd.f32 %v957, %v958
    %960 = vst [vmem:[#allocation7] sm:$0xff] %v890
    %961 = vst [vmem:[#allocation9] sm:$0xff] %v959
    // Predicated region
    $region18: #{tpu_custom_call.1} parent=1 // pred_check
      %p962 = pneg %p17
    $region19: #{tpu_custom_call.1} parent=1 // pred_check_branch
      %964 = sbr.rel (%p962) target = $region21
    $region20: #{tpu_custom_call.1} parent=1 // pred_region
      %v965 = vld [vmem:[#allocation2] sm:$0xff]
      %v966 = vld [vmem:[#allocation2 + $0x8] sm:$0xff]
      %v967 = vld [vmem:[#allocation2 + $0x10] sm:$0xff]
      %v968 = vld [vmem:[#allocation2 + $0x18] sm:$0xff]
      %v969 = vld [vmem:[#allocation2 + $0x20] sm:$0xff]
      %v970 = vld [vmem:[#allocation2 + $0x28] sm:$0xff]
      %v971 = vld [vmem:[#allocation2 + $0x30] sm:$0xff]
      %v972 = vld [vmem:[#allocation2 + $0x38] sm:$0xff]
      %v973 = vld [vmem:[#allocation2 + $0x40] sm:$0xff]
      %v974 = vld [vmem:[#allocation2 + $0x48] sm:$0xff]
      %v975 = vld [vmem:[#allocation2 + $0x50] sm:$0xff]
      %v976 = vld [vmem:[#allocation2 + $0x58] sm:$0xff]
      %v977 = vld [vmem:[#allocation2 + $0x60] sm:$0xff]
      %v978 = vld [vmem:[#allocation2 + $0x68] sm:$0xff]
      %v979 = vld [vmem:[#allocation2 + $0x70] sm:$0xff]
      %v980 = vld [vmem:[#allocation2 + $0x78] sm:$0xff]
      %v981 = vld [vmem:[#allocation3] sm:$0xff]
      %v982 = vld [vmem:[#allocation3 + $0x8] sm:$0xff]
      %v983 = vld [vmem:[#allocation3 + $0x10] sm:$0xff]
      %v984 = vld [vmem:[#allocation3 + $0x18] sm:$0xff]
      %v985 = vld [vmem:[#allocation3 + $0x20] sm:$0xff]
      %v986 = vld [vmem:[#allocation3 + $0x28] sm:$0xff]
      %v987 = vld [vmem:[#allocation3 + $0x30] sm:$0xff]
      %v988 = vld [vmem:[#allocation3 + $0x38] sm:$0xff]
      %v989 = vld [vmem:[#allocation3 + $0x40] sm:$0xff]
      %v990 = vld [vmem:[#allocation3 + $0x48] sm:$0xff]
      %v991 = vld [vmem:[#allocation3 + $0x50] sm:$0xff]
      %v992 = vld [vmem:[#allocation3 + $0x58] sm:$0xff]
      %v993 = vld [vmem:[#allocation3 + $0x60] sm:$0xff]
      %v994 = vld [vmem:[#allocation3 + $0x68] sm:$0xff]
      %v995 = vld [vmem:[#allocation3 + $0x70] sm:$0xff]
      %v996 = vld [vmem:[#allocation3 + $0x78] sm:$0xff]
      %v997 = vlog2.pop %v981
      %v998 = vmul.f32 %v997, 0.6931472
      %v999 = vlog2.pop %v982
      %v1000 = vmul.f32 %v999, 0.6931472
      %v1001 = vlog2.pop %v983
      %v1002 = vmul.f32 %v1001, 0.6931472
      %v1003 = vlog2.pop %v984
      %v1004 = vmul.f32 %v1003, 0.6931472
      %v1005 = vlog2.pop %v985
      %v1006 = vmul.f32 %v1005, 0.6931472
      %v1007 = vlog2.pop %v986
      %v1008 = vmul.f32 %v1007, 0.6931472
      %v1009 = vlog2.pop %v987
      %v1010 = vmul.f32 %v1009, 0.6931472
      %v1011 = vlog2.pop %v988
      %v1012 = vmul.f32 %v1011, 0.6931472
      %v1013 = vlog2.pop %v989
      %v1014 = vmul.f32 %v1013, 0.6931472
      %v1015 = vlog2.pop %v990
      %v1016 = vmul.f32 %v1015, 0.6931472
      %v1017 = vlog2.pop %v991
      %v1018 = vmul.f32 %v1017, 0.6931472
      %v1019 = vlog2.pop %v992
      %v1020 = vmul.f32 %v1019, 0.6931472
      %v1021 = vlog2.pop %v993
      %v1022 = vmul.f32 %v1021, 0.6931472
      %v1023 = vlog2.pop %v994
      %v1024 = vmul.f32 %v1023, 0.6931472
      %v1025 = vlog2.pop %v995
      %v1026 = vmul.f32 %v1025, 0.6931472
      %v1027 = vlog2.pop %v996
      %v1028 = vmul.f32 %v1027, 0.6931472
      %v1029 = vadd.f32 %v965, %v998
      %v1030 = vadd.f32 %v966, %v1000
      %v1031 = vadd.f32 %v967, %v1002
      %v1032 = vadd.f32 %v968, %v1004
      %v1033 = vadd.f32 %v969, %v1006
      %v1034 = vadd.f32 %v970, %v1008
      %v1035 = vadd.f32 %v971, %v1010
      %v1036 = vadd.f32 %v972, %v1012
      %v1037 = vadd.f32 %v973, %v1014
      %v1038 = vadd.f32 %v974, %v1016
      %v1039 = vadd.f32 %v975, %v1018
      %v1040 = vadd.f32 %v976, %v1020
      %v1041 = vadd.f32 %v977, %v1022
      %v1042 = vadd.f32 %v978, %v1024
      %v1043 = vadd.f32 %v979, %v1026
      %v1044 = vadd.f32 %v980, %v1028
      %vm1045 = vcmp.eq.s32.totalorder %v346, 0
      %vm1046 = vcmp.eq.s32.totalorder %v346, 1
      %v1047 = vld [vmem:[#allocation4] sm:$0xff]
      %v1048 = vld [vmem:[#allocation4 + $0x8] sm:$0xff]
      %v1049 = vld [vmem:[#allocation4 + $0x10] sm:$0xff]
      %v1050 = vld [vmem:[#allocation4 + $0x18] sm:$0xff]
      %v1051 = vld [vmem:[#allocation4 + $0x20] sm:$0xff]
      %v1052 = vld [vmem:[#allocation4 + $0x28] sm:$0xff]
      %v1053 = vld [vmem:[#allocation4 + $0x30] sm:$0xff]
      %v1054 = vld [vmem:[#allocation4 + $0x38] sm:$0xff]
      %v1055 = vld [vmem:[#allocation4 + $0x40] sm:$0xff]
      %v1056 = vld [vmem:[#allocation4 + $0x48] sm:$0xff]
      %v1057 = vld [vmem:[#allocation4 + $0x50] sm:$0xff]
      %v1058 = vld [vmem:[#allocation4 + $0x58] sm:$0xff]
      %v1059 = vld [vmem:[#allocation4 + $0x60] sm:$0xff]
      %v1060 = vld [vmem:[#allocation4 + $0x68] sm:$0xff]
      %v1061 = vld [vmem:[#allocation4 + $0x70] sm:$0xff]
      %v1062 = vld [vmem:[#allocation4 + $0x78] sm:$0xff]
      %1064 = vset.pattern.permute.xlu0 0
      %1065 = vperm.xlu0 %1064, %v1047
      %v1066 = vpop.permute.xlu0 %1065
      %1069 = vset.pattern.permute.xlu0 0
      %1070 = vperm.xlu0 %1069, %v1048
      %v1071 = vpop.permute.xlu0 %1070
      %1074 = vset.pattern.permute.xlu0 0
      %1075 = vperm.xlu0 %1074, %v1049
      %v1076 = vpop.permute.xlu0 %1075
      %1079 = vset.pattern.permute.xlu0 0
      %1080 = vperm.xlu0 %1079, %v1050
      %v1081 = vpop.permute.xlu0 %1080
      %1084 = vset.pattern.permute.xlu0 0
      %1085 = vperm.xlu0 %1084, %v1051
      %v1086 = vpop.permute.xlu0 %1085
      %1089 = vset.pattern.permute.xlu0 0
      %1090 = vperm.xlu0 %1089, %v1052
      %v1091 = vpop.permute.xlu0 %1090
      %1094 = vset.pattern.permute.xlu0 0
      %1095 = vperm.xlu0 %1094, %v1053
      %v1096 = vpop.permute.xlu0 %1095
      %1099 = vset.pattern.permute.xlu0 0
      %1100 = vperm.xlu0 %1099, %v1054
      %v1101 = vpop.permute.xlu0 %1100
      %1104 = vset.pattern.permute.xlu0 0
      %1105 = vperm.xlu0 %1104, %v1055
      %v1106 = vpop.permute.xlu0 %1105
      %1109 = vset.pattern.permute.xlu0 0
      %1110 = vperm.xlu0 %1109, %v1056
      %v1111 = vpop.permute.xlu0 %1110
      %1114 = vset.pattern.permute.xlu0 0
      %1115 = vperm.xlu0 %1114, %v1057
      %v1116 = vpop.permute.xlu0 %1115
      %1119 = vset.pattern.permute.xlu0 0
      %1120 = vperm.xlu0 %1119, %v1058
      %v1121 = vpop.permute.xlu0 %1120
      %1124 = vset.pattern.permute.xlu0 0
      %1125 = vperm.xlu0 %1124, %v1059
      %v1126 = vpop.permute.xlu0 %1125
      %1129 = vset.pattern.permute.xlu0 0
      %1130 = vperm.xlu0 %1129, %v1060
      %v1131 = vpop.permute.xlu0 %1130
      %1134 = vset.pattern.permute.xlu0 0
      %1135 = vperm.xlu0 %1134, %v1061
      %v1136 = vpop.permute.xlu0 %1135
      %1139 = vset.pattern.permute.xlu0 0
      %1140 = vperm.xlu0 %1139, %v1062
      %v1141 = vpop.permute.xlu0 %1140
      %v1143 = vsel %vm1046, %v1066, 0.0
      %v1144 = vsel %vm1046, %v1071, 0.0
      %v1145 = vsel %vm1046, %v1076, 0.0
      %v1146 = vsel %vm1046, %v1081, 0.0
      %v1147 = vsel %vm1046, %v1086, 0.0
      %v1148 = vsel %vm1046, %v1091, 0.0
      %v1149 = vsel %vm1046, %v1096, 0.0
      %v1150 = vsel %vm1046, %v1101, 0.0
      %v1151 = vsel %vm1046, %v1106, 0.0
      %v1152 = vsel %vm1046, %v1111, 0.0
      %v1153 = vsel %vm1046, %v1116, 0.0
      %v1154 = vsel %vm1046, %v1121, 0.0
      %v1155 = vsel %vm1046, %v1126, 0.0
      %v1156 = vsel %vm1046, %v1131, 0.0
      %v1157 = vsel %vm1046, %v1136, 0.0
      %v1158 = vsel %vm1046, %v1141, 0.0
      %1160 = vset.pattern.permute.xlu0 0
      %1161 = vperm.xlu0 %1160, %v1029
      %v1162 = vpop.permute.xlu0 %1161
      %1165 = vset.pattern.permute.xlu0 0
      %1166 = vperm.xlu0 %1165, %v1030
      %v1167 = vpop.permute.xlu0 %1166
      %1170 = vset.pattern.permute.xlu0 0
      %1171 = vperm.xlu0 %1170, %v1031
      %v1172 = vpop.permute.xlu0 %1171
      %1175 = vset.pattern.permute.xlu0 0
      %1176 = vperm.xlu0 %1175, %v1032
      %v1177 = vpop.permute.xlu0 %1176
      %1180 = vset.pattern.permute.xlu0 0
      %1181 = vperm.xlu0 %1180, %v1033
      %v1182 = vpop.permute.xlu0 %1181
      %1185 = vset.pattern.permute.xlu0 0
      %1186 = vperm.xlu0 %1185, %v1034
      %v1187 = vpop.permute.xlu0 %1186
      %1190 = vset.pattern.permute.xlu0 0
      %1191 = vperm.xlu0 %1190, %v1035
      %v1192 = vpop.permute.xlu0 %1191
      %1195 = vset.pattern.permute.xlu0 0
      %1196 = vperm.xlu0 %1195, %v1036
      %v1197 = vpop.permute.xlu0 %1196
      %1200 = vset.pattern.permute.xlu0 0
      %1201 = vperm.xlu0 %1200, %v1037
      %v1202 = vpop.permute.xlu0 %1201
      %1205 = vset.pattern.permute.xlu0 0
      %1206 = vperm.xlu0 %1205, %v1038
      %v1207 = vpop.permute.xlu0 %1206
      %1210 = vset.pattern.permute.xlu0 0
      %1211 = vperm.xlu0 %1210, %v1039
      %v1212 = vpop.permute.xlu0 %1211
      %1215 = vset.pattern.permute.xlu0 0
      %1216 = vperm.xlu0 %1215, %v1040
      %v1217 = vpop.permute.xlu0 %1216
      %1220 = vset.pattern.permute.xlu0 0
      %1221 = vperm.xlu0 %1220, %v1041
      %v1222 = vpop.permute.xlu0 %1221
      %1225 = vset.pattern.permute.xlu0 0
      %1226 = vperm.xlu0 %1225, %v1042
      %v1227 = vpop.permute.xlu0 %1226
      %1230 = vset.pattern.permute.xlu0 0
      %1231 = vperm.xlu0 %1230, %v1043
      %v1232 = vpop.permute.xlu0 %1231
      %1235 = vset.pattern.permute.xlu0 0
      %1236 = vperm.xlu0 %1235, %v1044
      %v1237 = vpop.permute.xlu0 %1236
      %v1239 = vsel %vm1045, %v1162, %v1143
      %v1240 = vsel %vm1045, %v1167, %v1144
      %v1241 = vsel %vm1045, %v1172, %v1145
      %v1242 = vsel %vm1045, %v1177, %v1146
      %v1243 = vsel %vm1045, %v1182, %v1147
      %v1244 = vsel %vm1045, %v1187, %v1148
      %v1245 = vsel %vm1045, %v1192, %v1149
      %v1246 = vsel %vm1045, %v1197, %v1150
      %v1247 = vsel %vm1045, %v1202, %v1151
      %v1248 = vsel %vm1045, %v1207, %v1152
      %v1249 = vsel %vm1045, %v1212, %v1153
      %v1250 = vsel %vm1045, %v1217, %v1154
      %v1251 = vsel %vm1045, %v1222, %v1155
      %v1252 = vsel %vm1045, %v1227, %v1156
      %v1253 = vsel %vm1045, %v1232, %v1157
      %v1254 = vsel %vm1045, %v1237, %v1158
      %1255 = vst [vmem:[#allocation5] sm:$0xff] %v1239
      %1256 = vst [vmem:[#allocation5 + $0x8] sm:$0xff] %v1240
      %1257 = vst [vmem:[#allocation5 + $0x10] sm:$0xff] %v1241
      %1258 = vst [vmem:[#allocation5 + $0x18] sm:$0xff] %v1242
      %1259 = vst [vmem:[#allocation5 + $0x20] sm:$0xff] %v1243
      %1260 = vst [vmem:[#allocation5 + $0x28] sm:$0xff] %v1244
      %1261 = vst [vmem:[#allocation5 + $0x30] sm:$0xff] %v1245
      %1262 = vst [vmem:[#allocation5 + $0x38] sm:$0xff] %v1246
      %1263 = vst [vmem:[#allocation5 + $0x40] sm:$0xff] %v1247
      %1264 = vst [vmem:[#allocation5 + $0x48] sm:$0xff] %v1248
      %1265 = vst [vmem:[#allocation5 + $0x50] sm:$0xff] %v1249
      %1266 = vst [vmem:[#allocation5 + $0x58] sm:$0xff] %v1250
      %1267 = vst [vmem:[#allocation5 + $0x60] sm:$0xff] %v1251
      %1268 = vst [vmem:[#allocation5 + $0x68] sm:$0xff] %v1252
      %1269 = vst [vmem:[#allocation5 + $0x70] sm:$0xff] %v1253
      %1270 = vst [vmem:[#allocation5 + $0x78] sm:$0xff] %v1254
    $region21: #{tpu_custom_call.1} parent=1 // pred_fallthru
      _
    // Predicated region
    $region22: #{tpu_custom_call.1} parent=1 // pred_check
      _
    $region23: #{tpu_custom_call.1} parent=1 // pred_check_branch
      %1272 = sbr.rel (0) target = $region25
    $region24: #{tpu_custom_call.1} parent=1 // pred_region
      %s1274 = ssub.s32 2048, 2048
      %1275 = vsyncadd [#allocation6], %s1274
      %s1276 = sshll.u32 [#allocation5], 4
      %s1277 = int_to_ptr.vmem [resolvable:$true] %s1276
      %1282 = dma.vmem_to_hbm [thread:$0]  %s1277, 2048, %s2, [#allocation6], 128, 128, 8
    $region25: #{tpu_custom_call.1} parent=1 // pred_fallthru
      _
    // Predicated region
    $region26: #{tpu_custom_call.1} parent=1 // pred_check
      _
    $region27: #{tpu_custom_call.1} parent=1 // pred_check_branch
      %1284 = sbr.rel (0) target = $region29
    $region28: #{tpu_custom_call.1} parent=1 // pred_region
      %s1286 = ssub.s32 128, 128
      %1287 = vsyncadd [#allocation8], %s1286
      %s1289 = sshll.u32 [#allocation7], 4
      %s1290 = int_to_ptr.vmem [resolvable:$true] %s1289
      %1292 = dma.vmem_to_hbm [thread:$0]  %s1290, 128, %s3, [#allocation8]
    $region29: #{tpu_custom_call.1} parent=1 // pred_fallthru
      _
    // Predicated region
    $region30: #{tpu_custom_call.1} parent=1 // pred_check
      _
    $region31: #{tpu_custom_call.1} parent=1 // pred_check_branch
      %1294 = sbr.rel (0) target = $region33
    $region32: #{tpu_custom_call.1} parent=1 // pred_region
      %s1296 = ssub.s32 128, 128
      %1297 = vsyncadd [#allocation8], %s1296
      %s1299 = sshll.u32 [#allocation9], 4
      %s1300 = int_to_ptr.vmem [resolvable:$true] %s1299
      %1302 = dma.vmem_to_hbm [thread:$0]  %s1300, 128, %s4, [#allocation8]
    $region33: #{tpu_custom_call.1} parent=1 // pred_fallthru
      _
    // Predicated region
    $region34: #{tpu_custom_call.1} parent=1 // pred_check
      _
    $region35: #{tpu_custom_call.1} parent=1 // pred_check_branch
      %1304 = sbr.rel (0) target = $region37
    $region36: #{tpu_custom_call.1} parent=1 // pred_region
      %1305 = dma.done [#allocation6], 2048
    $region37: #{tpu_custom_call.1} parent=1 // pred_fallthru
      _
    // Predicated region
    $region38: #{tpu_custom_call.1} parent=1 // pred_check
      _
    $region39: #{tpu_custom_call.1} parent=1 // pred_check_branch
      %1307 = sbr.rel (0) target = $region41
    $region40: #{tpu_custom_call.1} parent=1 // pred_region
      %1308 = dma.done [#allocation8], 128
    $region41: #{tpu_custom_call.1} parent=1 // pred_fallthru
      _
    // Predicated region
    $region42: #{tpu_custom_call.1} parent=1 // pred_check
      _
    $region43: #{tpu_custom_call.1} parent=1 // pred_check_branch
      %1310 = sbr.rel (0) target = $region45
    $region44: #{tpu_custom_call.1} parent=1 // pred_region
      %1311 = dma.done [#allocation8], 128
    $region45: #{tpu_custom_call.1} parent=1 // pred_fallthru
      _
    %1312 = vsyncpa [#allocation6], 1
    %1313 = vsyncpa [#allocation8], 1

</llo_original>
